<compile_context>
chip_gen: v7x
topology: tpu7x:2x2x1
jax: 0.10.0
libtpu: 0.0.40
codegen_flags: <defaults>
</compile_context>

<pallas_src>
import functools

import jax
import jax.numpy as jnp
from jax import lax
from jax.experimental import pallas as pl
from jax.experimental.pallas import tpu as pltpu


# ----------------------------------------------------------------------------
# Adaptive 3x3 kernel rotation helpers (batch independent part)
# ----------------------------------------------------------------------------
_RING = (0, 1, 2, 5, 8, 7, 6, 3)        # clockwise outer ring of a 3x3 kernel
_RING_PREV = (3, 0, 1, 2, 5, 8, 7, 6)   # ring shifted by one 45-degree step


def _ring_shifted(weight9):
    # weight9: (..., 9). One-step (45deg) rotation of the 8 outer taps; the
    # center tap stays fixed.
    ring = jnp.array(_RING)
    ring_prev = jnp.array(_RING_PREV)
    return weight9.at[..., ring].set(weight9[..., ring_prev])


def _rotate_weights(weight, theta):
    # Used only by the pure-JAX reference.
    # TODO(synk): source of rotate_3x3_kernel_adaptive_forloop is not provided;
    # modeled as bilinear interpolation of the 8 outer taps toward a one-step
    # ring shift by theta (fraction of one 45-degree step), center tap fixed.
    E, Co, Ci, k, _ = weight.shape
    assert k == 3
    w9 = weight.reshape(E, Co, Ci, 9)
    ws = _ring_shifted(w9)
    t = theta[:, :, None, None, None]                # (n, E, 1, 1, 1)
    return (1.0 - t) * w9[None] + t * ws[None]       # (n, E, Co, Ci, 9)


# ----------------------------------------------------------------------------
# Fused kernel: gating head + per-batch weight combine + conv (per batch item)
# ----------------------------------------------------------------------------
def _fused_kernel(x_ref, fcw_ref, fcb_ref, wbase_ref, wshift_ref, out_ref, *,
                  num_experts, kernel_size, wp, dilation, hw, proportion):
    E, k, d = num_experts, kernel_size, dilation
    co, n_out = out_ref.shape[1], out_ref.shape[2]

    # --- gating head: global average pool + fused (a|theta) FC + sigmoid ----
    # zero padding / tail do not change the sum, so divide by the original H*W.
    xsum = jnp.sum(x_ref[0].astype(jnp.float32), axis=1)            # (Ci,)
    avg = (xsum * (1.0 / hw))[None, :]                               # (1, Ci)
    logits = (jnp.dot(avg, fcw_ref[...], preferred_element_type=jnp.float32)
              + fcb_ref[...])                                        # (1, 2E)
    gact = jax.nn.sigmoid(logits)

    # --- per-batch rotated + gate-combined per-tap weights (f32 VPU combine) --
    #   wc[t] = sum_e gate_e * ((1 - theta_e) * W_e[t] + theta_e * Wshift_e[t])
    wc = None
    for eidx in range(E):
        g = gact[0:1, eidx:eidx + 1]                                 # (1, 1)
        th = gact[0:1, E + eidx:E + eidx + 1] * proportion           # (1, 1)
        c0 = (g * (1.0 - th)).reshape(1, 1, 1)
        c1 = (g * th).reshape(1, 1, 1)
        term = c0 * wbase_ref[eidx] + c1 * wshift_ref[eidx]          # (9, Co, Ci)
        wc = term if wc is None else wc + term
    wc = wc.astype(x_ref.dtype)     # cast to compute dtype just before the MXU

    # --- conv: 9 accumulating (Co,Ci) @ (Ci,N) MXU matmuls over shifted views.
    # The padded image is flattened row-major into the lane dim, so every tap's
    # shifted view is one contiguous lane slice (the (k-1)*d wrap columns per
    # row are cropped by the wrapper).
    acc = jnp.zeros((co, n_out), jnp.float32)
    for ky in range(k):
        for kx in range(k):
            t = ky * k + kx
            start = (ky * wp + kx) * d
            xs = x_ref[0, :, pl.ds(start, n_out)]                    # (Ci, N)
            acc = acc + jnp.dot(wc[t], xs, preferred_element_type=jnp.float32)
    out_ref[0] = acc.astype(out_ref.dtype)


# ----------------------------------------------------------------------------
# Device-derived VMEM budget
# ----------------------------------------------------------------------------
def _vmem_limit_bytes():
    cap = 64 * 1024 * 1024          # conservative default (v7x per-TC VMEM)
    try:
        cap = int(getattr(pltpu.get_tpu_info(), "vmem_capacity_bytes", cap))
    except Exception:
        pass
    # headroom for Mosaic internal scratch; don't over-ask on big-VMEM parts.
    return max(32 * 1024 * 1024, min(int(cap * 0.8), 100 * 1024 * 1024))


# ----------------------------------------------------------------------------
# Forward wrapper
# ----------------------------------------------------------------------------
def cond_rot_conv2d_forward(x, params, *, num_experts, out_channels, kernel_size,
                            stride=1, padding=0, dilation=1, groups=1,
                            proportion=1.0, compute_dtype=jnp.bfloat16):
    assert groups == 1  # module default; grouped variant not needed here
    n, ci, h, w = x.shape
    k, e, co, d = kernel_size, num_experts, out_channels, dilation
    assert k == 3, "adaptive rotation is defined for 3x3 kernels"

    hp, wp = h + 2 * padding, w + 2 * padding
    ho = (hp - d * (k - 1) - 1) // stride + 1       # module output extents
    wo = (wp - d * (k - 1) - 1) // stride + 1
    ho1 = hp - d * (k - 1)                          # stride-1 rows computed in-kernel
    n_out = ho1 * wp                                # keep all wp columns per row
    tail = d * (k - 1)
    lflat = hp * wp + tail

    # x -> zero-padded image, rows flattened into the lane dim + tiny tail pad so
    # every tap's shifted view is a single in-bounds contiguous slice. Read once
    # by the kernel (no im2col, no K padding); bf16 halves the dominant DMA.
    x_pad = jnp.pad(x, ((0, 0), (0, 0), (padding, padding), (padding, padding)))
    x_flat = jnp.pad(x_pad.reshape(n, ci, hp * wp), ((0, 0), (0, 0), (0, tail)))
    x_flat = x_flat.astype(compute_dtype)

    # Batch-independent expert weights as per-tap (Co, Ci) matrices: base + a
    # one-step ring-shifted copy. The per-batch rotation/gating combine happens
    # inside the kernel, so no n-scaled weight tensor ever touches HBM.
    weight9 = params["weight"].reshape(e, co, ci, k * k).astype(jnp.float32)
    wshift9 = _ring_shifted(weight9)
    wbase_t = jnp.transpose(weight9, (0, 3, 1, 2))   # (E, 9, Co, Ci)
    wshift_t = jnp.transpose(wshift9, (0, 3, 1, 2))  # (E, 9, Co, Ci)

    # Fused gating FC: one (Ci, 2E) operand + (1, 2E) bias, one in-kernel dot.
    fcw = jnp.concatenate([params["fc_a_w"].T, params["fc_theta_w"].T],
                          axis=1).astype(jnp.float32)
    fcb = jnp.concatenate([params["fc_a_b"], params["fc_theta_b"]]
                          )[None, :].astype(jnp.float32)

    # TODO(synk): for very large Ci*H*W / Co*H*W the whole-image-per-batch blocks
    # would need a row-tiled variant with a manual halo DMA; not needed here.
    out_flat = pl.pallas_call(
        functools.partial(_fused_kernel, num_experts=e, kernel_size=k, wp=wp,
                          dilation=d, hw=float(h * w), proportion=float(proportion)),
        out_shape=jax.ShapeDtypeStruct((n, co, n_out), jnp.float32),
        grid=(n,),
        in_specs=[
            pl.BlockSpec((1, ci, lflat), lambda b: (b, 0, 0)),         # x (flat)
            pl.BlockSpec((ci, 2 * e), lambda b: (0, 0)),               # fused FC w
            pl.BlockSpec((1, 2 * e), lambda b: (0, 0)),                # fused FC b
            pl.BlockSpec((e, k * k, co, ci), lambda b: (0, 0, 0, 0)),  # expert taps
            pl.BlockSpec((e, k * k, co, ci), lambda b: (0, 0, 0, 0)),  # shifted taps
        ],
        out_specs=pl.BlockSpec((1, co, n_out), lambda b: (b, 0, 0)),
        compiler_params=pltpu.CompilerParams(
            dimension_semantics=("parallel",),        # v7x: shard batch over 2 TCs
            vmem_limit_bytes=_vmem_limit_bytes()),
    )(x_flat, fcw, fcb, wbase_t, wshift_t)

    # Undo the flat layout: crop the (k-1)*d wrap columns, apply the stride.
    out = out_flat.reshape(n, co, ho1, wp)
    out = out[:, :, ::stride, ::stride][:, :, :ho, :wo]
    return out


# ----------------------------------------------------------------------------
# Pure-JAX reference (mirrors the PyTorch forward: reshape + grouped conv2d)
# ----------------------------------------------------------------------------
def reference_forward(x, params, *, num_experts, out_channels, kernel_size,
                      stride=1, padding=0, dilation=1, proportion=1.0):
    n, ci, h, w = x.shape
    k, e, co = kernel_size, num_experts, out_channels
    avg = x.mean(axis=(2, 3))
    gate = jax.nn.sigmoid(avg @ params["fc_a_w"].T + params["fc_a_b"])
    theta = jax.nn.sigmoid(avg @ params["fc_theta_w"].T + params["fc_theta_b"]) * proportion
    weight = params["weight"].reshape(e, co, ci, k, k)
    rot = _rotate_weights(weight, theta)                         # (n, E, Co, Ci, 9)
    wcomb = jnp.einsum("ne,nef->nf", gate, rot.reshape(n, e, -1))
    wcomb = wcomb.reshape(n * co, ci, k, k)
    out = lax.conv_general_dilated(
        x.reshape(1, n * ci, h, w), wcomb,
        window_strides=(stride, stride),
        padding=[(padding, padding), (padding, padding)],
        rhs_dilation=(dilation, dilation),
        dimension_numbers=("NCHW", "OIHW", "NCHW"),
        feature_group_count=n)
    return out.reshape(n, co, out.shape[2], out.shape[3])


if __name__ == "__main__":
    key = jax.random.PRNGKey(0)
    n, ci, co, e, h, w, k = 2, 4, 8, 4, 16, 16, 3
    stride, padding, dilation, proportion = 1, 1, 1, 1.0

    k1, k2, k3, k4, k5, k6 = jax.random.split(key, 6)
    params = dict(
        weight=jax.random.normal(k1, (e * co, ci, k, k), jnp.float32) * 0.1,
        fc_a_w=jax.random.normal(k2, (e, ci), jnp.float32) * 0.2,
        fc_a_b=jax.random.normal(k3, (e,), jnp.float32) * 0.1,
        fc_theta_w=jax.random.normal(k4, (e, ci), jnp.float32) * 0.2,
        fc_theta_b=jax.random.normal(k5, (e,), jnp.float32) * 0.1,
    )
    x = jax.random.normal(k6, (n, ci, h, w), jnp.float32)

    common = dict(num_experts=e, out_channels=co, kernel_size=k, stride=stride,
                  padding=padding, dilation=dilation, groups=1,
                  proportion=proportion)

    # default (bf16 compute) path and an f32 path for a tight structural check
    out_bf16 = jax.block_until_ready(
        cond_rot_conv2d_forward(x, params, compute_dtype=jnp.bfloat16, **common))
    out_f32 = jax.block_until_ready(
        cond_rot_conv2d_forward(x, params, compute_dtype=jnp.float32, **common))

    ref = reference_forward(
        x, params, num_experts=e, out_channels=co, kernel_size=k,
        stride=stride, padding=padding, dilation=dilation, proportion=proportion)

    assert out_f32.shape == (n, co, h, w), out_f32.shape
    assert out_bf16.shape == (n, co, h, w), out_bf16.shape
    err_f32 = float(jnp.max(jnp.abs(out_f32 - ref)))
    err_bf16 = float(jnp.max(jnp.abs(out_bf16 - ref)))
    assert err_f32 < 5e-3, f"f32 max abs error {err_f32}"
    assert err_bf16 < 3e-2, f"bf16 max abs error {err_bf16}"
    print("KERNEL_OK")
</pallas_src>

<mosaic_0001>
module attributes {stable_mosaic.version = 11 : i64} {
  func.func @_fused_kernel(%arg0: i32, %arg1: memref<1x4x326xbf16, #tpu.memory_space<vmem>>, %arg2: memref<4x8xf32, #tpu.memory_space<vmem>>, %arg3: memref<1x8xf32, #tpu.memory_space<vmem>>, %arg4: memref<4x9x8x4xf32, #tpu.memory_space<vmem>>, %arg5: memref<4x9x8x4xf32, #tpu.memory_space<vmem>>, %arg6: memref<1x8x288xf32, #tpu.memory_space<vmem>>) attributes {dimension_semantics = [#tpu.dimension_semantics<parallel>], iteration_bounds = array<i64: 2>, scalar_prefetch = 0 : i64, scratch_operands = 0 : i64, tpu.core_type = #tpu.core_type<tc>, window_params = [{transform_indices = @transform_0, window_bounds = array<i64: 1, 4, 326>}, {pipeline_mode = #tpu.pipeline_mode<synchronous>, transform_indices = @transform_1, window_bounds = array<i64: 4, 8>}, {pipeline_mode = #tpu.pipeline_mode<synchronous>, transform_indices = @transform_2, window_bounds = array<i64: 1, 8>}, {pipeline_mode = #tpu.pipeline_mode<synchronous>, transform_indices = @transform_3, window_bounds = array<i64: 4, 9, 8, 4>}, {pipeline_mode = #tpu.pipeline_mode<synchronous>, transform_indices = @transform_4, window_bounds = array<i64: 4, 9, 8, 4>}, {transform_indices = @transform_5, window_bounds = array<i64: 1, 8, 288>}]} {
    %c0 = arith.constant 0 : index
    %c0_0 = arith.constant 0 : index
    %c0_1 = arith.constant 0 : index
    %0 = vector.load %arg1[%c0, %c0_0, %c0_1] : memref<1x4x326xbf16, #tpu.memory_space<vmem>>, vector<1x4x326xbf16>
    %1 = vector.shape_cast %0 : vector<1x4x326xbf16> to vector<4x326xbf16>
    %2 = arith.extf %1 : vector<4x326xbf16> to vector<4x326xf32>
    %cst = arith.constant dense<0.000000e+00> : vector<4xf32>
    %3 = vector.multi_reduction <add>, %2, %cst [1] : vector<4x326xf32> to vector<4xf32>
    %cst_2 = arith.constant 3.906250e-03 : f32
    %4 = vector.broadcast %cst_2 : f32 to vector<4xf32>
    %5 = arith.mulf %3, %4 : vector<4xf32>
    %6 = vector.shape_cast %5 : vector<4xf32> to vector<1x4xf32>
    %c0_3 = arith.constant 0 : index
    %c0_4 = arith.constant 0 : index
    %7 = vector.load %arg2[%c0_3, %c0_4] : memref<4x8xf32, #tpu.memory_space<vmem>>, vector<4x8xf32>
    %cst_5 = arith.constant dense<0.000000e+00> : vector<1x8xf32>
    %8 = tpu.matmul %6, %7, %cst_5 {dimension_numbers = #tpu.dot_dimension_numbers<[1], [0], [0], [1], [0, 0, 1, 1], [], []>} : vector<1x4xf32>, vector<4x8xf32>, vector<1x8xf32> -> vector<1x8xf32>
    %c0_6 = arith.constant 0 : index
    %c0_7 = arith.constant 0 : index
    %9 = vector.load %arg3[%c0_6, %c0_7] : memref<1x8xf32, #tpu.memory_space<vmem>>, vector<1x8xf32>
    %10 = arith.addf %8, %9 : vector<1x8xf32>
    %11 = arith.negf %10 : vector<1x8xf32>
    %12 = math.exp %11 : vector<1x8xf32>
    %cst_8 = arith.constant 1.000000e+00 : f32
    %13 = vector.broadcast %cst_8 : f32 to vector<1x8xf32>
    %14 = arith.addf %13, %12 : vector<1x8xf32>
    %15 = arith.divf %13, %14 : vector<1x8xf32>
    %16 = vector.extract_strided_slice %15 {offsets = [0, 0], sizes = [1, 1], strides = [1, 1]} : vector<1x8xf32> to vector<1x1xf32>
    %17 = vector.extract_strided_slice %15 {offsets = [0, 4], sizes = [1, 1], strides = [1, 1]} : vector<1x8xf32> to vector<1x1xf32>
    %cst_9 = arith.constant 1.000000e+00 : f32
    %18 = vector.broadcast %cst_9 : f32 to vector<1x1xf32>
    %19 = arith.mulf %17, %18 : vector<1x1xf32>
    %cst_10 = arith.constant 1.000000e+00 : f32
    %20 = vector.broadcast %cst_10 : f32 to vector<1x1xf32>
    %21 = arith.subf %20, %19 : vector<1x1xf32>
    %22 = arith.mulf %16, %21 : vector<1x1xf32>
    %23 = vector.shape_cast %22 : vector<1x1xf32> to vector<1x1x1xf32>
    %24 = arith.mulf %16, %19 : vector<1x1xf32>
    %25 = vector.shape_cast %24 : vector<1x1xf32> to vector<1x1x1xf32>
    %c0_11 = arith.constant 0 : index
    %c0_12 = arith.constant 0 : index
    %c0_13 = arith.constant 0 : index
    %c0_14 = arith.constant 0 : index
    %26 = vector.load %arg4[%c0_11, %c0_12, %c0_13, %c0_14] : memref<4x9x8x4xf32, #tpu.memory_space<vmem>>, vector<1x9x8x4xf32>
    %27 = vector.shape_cast %26 : vector<1x9x8x4xf32> to vector<9x8x4xf32>
    %28 = vector.broadcast %23 : vector<1x1x1xf32> to vector<9x8x4xf32>
    %29 = arith.mulf %28, %27 : vector<9x8x4xf32>
    %c0_15 = arith.constant 0 : index
    %c0_16 = arith.constant 0 : index
    %c0_17 = arith.constant 0 : index
    %c0_18 = arith.constant 0 : index
    %30 = vector.load %arg5[%c0_15, %c0_16, %c0_17, %c0_18] : memref<4x9x8x4xf32, #tpu.memory_space<vmem>>, vector<1x9x8x4xf32>
    %31 = vector.shape_cast %30 : vector<1x9x8x4xf32> to vector<9x8x4xf32>
    %32 = vector.broadcast %25 : vector<1x1x1xf32> to vector<9x8x4xf32>
    %33 = arith.mulf %32, %31 : vector<9x8x4xf32>
    %34 = arith.addf %29, %33 : vector<9x8x4xf32>
    %35 = vector.extract_strided_slice %15 {offsets = [0, 1], sizes = [1, 1], strides = [1, 1]} : vector<1x8xf32> to vector<1x1xf32>
    %36 = vector.extract_strided_slice %15 {offsets = [0, 5], sizes = [1, 1], strides = [1, 1]} : vector<1x8xf32> to vector<1x1xf32>
    %cst_19 = arith.constant 1.000000e+00 : f32
    %37 = vector.broadcast %cst_19 : f32 to vector<1x1xf32>
    %38 = arith.mulf %36, %37 : vector<1x1xf32>
    %cst_20 = arith.constant 1.000000e+00 : f32
    %39 = vector.broadcast %cst_20 : f32 to vector<1x1xf32>
    %40 = arith.subf %39, %38 : vector<1x1xf32>
    %41 = arith.mulf %35, %40 : vector<1x1xf32>
    %42 = vector.shape_cast %41 : vector<1x1xf32> to vector<1x1x1xf32>
    %43 = arith.mulf %35, %38 : vector<1x1xf32>
    %44 = vector.shape_cast %43 : vector<1x1xf32> to vector<1x1x1xf32>
    %c1 = arith.constant 1 : index
    %c0_21 = arith.constant 0 : index
    %c0_22 = arith.constant 0 : index
    %c0_23 = arith.constant 0 : index
    %45 = vector.load %arg4[%c1, %c0_21, %c0_22, %c0_23] : memref<4x9x8x4xf32, #tpu.memory_space<vmem>>, vector<1x9x8x4xf32>
    %46 = vector.shape_cast %45 : vector<1x9x8x4xf32> to vector<9x8x4xf32>
    %47 = vector.broadcast %42 : vector<1x1x1xf32> to vector<9x8x4xf32>
    %48 = arith.mulf %47, %46 : vector<9x8x4xf32>
    %c1_24 = arith.constant 1 : index
    %c0_25 = arith.constant 0 : index
    %c0_26 = arith.constant 0 : index
    %c0_27 = arith.constant 0 : index
    %49 = vector.load %arg5[%c1_24, %c0_25, %c0_26, %c0_27] : memref<4x9x8x4xf32, #tpu.memory_space<vmem>>, vector<1x9x8x4xf32>
    %50 = vector.shape_cast %49 : vector<1x9x8x4xf32> to vector<9x8x4xf32>
    %51 = vector.broadcast %44 : vector<1x1x1xf32> to vector<9x8x4xf32>
    %52 = arith.mulf %51, %50 : vector<9x8x4xf32>
    %53 = arith.addf %48, %52 : vector<9x8x4xf32>
    %54 = arith.addf %34, %53 : vector<9x8x4xf32>
    %55 = vector.extract_strided_slice %15 {offsets = [0, 2], sizes = [1, 1], strides = [1, 1]} : vector<1x8xf32> to vector<1x1xf32>
    %56 = vector.extract_strided_slice %15 {offsets = [0, 6], sizes = [1, 1], strides = [1, 1]} : vector<1x8xf32> to vector<1x1xf32>
    %cst_28 = arith.constant 1.000000e+00 : f32
    %57 = vector.broadcast %cst_28 : f32 to vector<1x1xf32>
    %58 = arith.mulf %56, %57 : vector<1x1xf32>
    %cst_29 = arith.constant 1.000000e+00 : f32
    %59 = vector.broadcast %cst_29 : f32 to vector<1x1xf32>
    %60 = arith.subf %59, %58 : vector<1x1xf32>
    %61 = arith.mulf %55, %60 : vector<1x1xf32>
    %62 = vector.shape_cast %61 : vector<1x1xf32> to vector<1x1x1xf32>
    %63 = arith.mulf %55, %58 : vector<1x1xf32>
    %64 = vector.shape_cast %63 : vector<1x1xf32> to vector<1x1x1xf32>
    %c2 = arith.constant 2 : index
    %c0_30 = arith.constant 0 : index
    %c0_31 = arith.constant 0 : index
    %c0_32 = arith.constant 0 : index
    %65 = vector.load %arg4[%c2, %c0_30, %c0_31, %c0_32] : memref<4x9x8x4xf32, #tpu.memory_space<vmem>>, vector<1x9x8x4xf32>
    %66 = vector.shape_cast %65 : vector<1x9x8x4xf32> to vector<9x8x4xf32>
    %67 = vector.broadcast %62 : vector<1x1x1xf32> to vector<9x8x4xf32>
    %68 = arith.mulf %67, %66 : vector<9x8x4xf32>
    %c2_33 = arith.constant 2 : index
    %c0_34 = arith.constant 0 : index
    %c0_35 = arith.constant 0 : index
    %c0_36 = arith.constant 0 : index
    %69 = vector.load %arg5[%c2_33, %c0_34, %c0_35, %c0_36] : memref<4x9x8x4xf32, #tpu.memory_space<vmem>>, vector<1x9x8x4xf32>
    %70 = vector.shape_cast %69 : vector<1x9x8x4xf32> to vector<9x8x4xf32>
    %71 = vector.broadcast %64 : vector<1x1x1xf32> to vector<9x8x4xf32>
    %72 = arith.mulf %71, %70 : vector<9x8x4xf32>
    %73 = arith.addf %68, %72 : vector<9x8x4xf32>
    %74 = arith.addf %54, %73 : vector<9x8x4xf32>
    %75 = vector.extract_strided_slice %15 {offsets = [0, 3], sizes = [1, 1], strides = [1, 1]} : vector<1x8xf32> to vector<1x1xf32>
    %76 = vector.extract_strided_slice %15 {offsets = [0, 7], sizes = [1, 1], strides = [1, 1]} : vector<1x8xf32> to vector<1x1xf32>
    %cst_37 = arith.constant 1.000000e+00 : f32
    %77 = vector.broadcast %cst_37 : f32 to vector<1x1xf32>
    %78 = arith.mulf %76, %77 : vector<1x1xf32>
    %cst_38 = arith.constant 1.000000e+00 : f32
    %79 = vector.broadcast %cst_38 : f32 to vector<1x1xf32>
    %80 = arith.subf %79, %78 : vector<1x1xf32>
    %81 = arith.mulf %75, %80 : vector<1x1xf32>
    %82 = vector.shape_cast %81 : vector<1x1xf32> to vector<1x1x1xf32>
    %83 = arith.mulf %75, %78 : vector<1x1xf32>
    %84 = vector.shape_cast %83 : vector<1x1xf32> to vector<1x1x1xf32>
    %c3 = arith.constant 3 : index
    %c0_39 = arith.constant 0 : index
    %c0_40 = arith.constant 0 : index
    %c0_41 = arith.constant 0 : index
    %85 = vector.load %arg4[%c3, %c0_39, %c0_40, %c0_41] : memref<4x9x8x4xf32, #tpu.memory_space<vmem>>, vector<1x9x8x4xf32>
    %86 = vector.shape_cast %85 : vector<1x9x8x4xf32> to vector<9x8x4xf32>
    %87 = vector.broadcast %82 : vector<1x1x1xf32> to vector<9x8x4xf32>
    %88 = arith.mulf %87, %86 : vector<9x8x4xf32>
    %c3_42 = arith.constant 3 : index
    %c0_43 = arith.constant 0 : index
    %c0_44 = arith.constant 0 : index
    %c0_45 = arith.constant 0 : index
    %89 = vector.load %arg5[%c3_42, %c0_43, %c0_44, %c0_45] : memref<4x9x8x4xf32, #tpu.memory_space<vmem>>, vector<1x9x8x4xf32>
    %90 = vector.shape_cast %89 : vector<1x9x8x4xf32> to vector<9x8x4xf32>
    %91 = vector.broadcast %84 : vector<1x1x1xf32> to vector<9x8x4xf32>
    %92 = arith.mulf %91, %90 : vector<9x8x4xf32>
    %93 = arith.addf %88, %92 : vector<9x8x4xf32>
    %94 = arith.addf %74, %93 : vector<9x8x4xf32>
    %95 = arith.truncf %94 : vector<9x8x4xf32> to vector<9x8x4xbf16>
    %cst_46 = arith.constant 0.000000e+00 : f32
    %96 = vector.broadcast %cst_46 : f32 to vector<8x288xf32>
    %c0_47 = arith.constant 0 : index
    %c0_48 = arith.constant 0 : index
    %c0_49 = arith.constant 0 : index
    %97 = vector.load %arg1[%c0_47, %c0_48, %c0_49] : memref<1x4x326xbf16, #tpu.memory_space<vmem>>, vector<1x4x288xbf16>
    %98 = vector.shape_cast %97 : vector<1x4x288xbf16> to vector<4x288xbf16>
    %99 = vector.extract_strided_slice %95 {offsets = [0, 0, 0], sizes = [1, 8, 4], strides = [1, 1, 1]} : vector<9x8x4xbf16> to vector<1x8x4xbf16>
    %100 = vector.shape_cast %99 : vector<1x8x4xbf16> to vector<8x4xbf16>
    %cst_50 = arith.constant dense<0.000000e+00> : vector<8x288xf32>
    %101 = tpu.matmul %100, %98, %cst_50 {dimension_numbers = #tpu.dot_dimension_numbers<[1], [0], [0], [1], [0, 0, 1, 1], [], []>} : vector<8x4xbf16>, vector<4x288xbf16>, vector<8x288xf32> -> vector<8x288xf32>
    %102 = arith.addf %96, %101 : vector<8x288xf32>
    %c0_51 = arith.constant 0 : index
    %c0_52 = arith.constant 0 : index
    %c1_53 = arith.constant 1 : index
    %103 = vector.load %arg1[%c0_51, %c0_52, %c1_53] : memref<1x4x326xbf16, #tpu.memory_space<vmem>>, vector<1x4x288xbf16>
    %104 = vector.shape_cast %103 : vector<1x4x288xbf16> to vector<4x288xbf16>
    %105 = vector.extract_strided_slice %95 {offsets = [1, 0, 0], sizes = [1, 8, 4], strides = [1, 1, 1]} : vector<9x8x4xbf16> to vector<1x8x4xbf16>
    %106 = vector.shape_cast %105 : vector<1x8x4xbf16> to vector<8x4xbf16>
    %cst_54 = arith.constant dense<0.000000e+00> : vector<8x288xf32>
    %107 = tpu.matmul %106, %104, %cst_54 {dimension_numbers = #tpu.dot_dimension_numbers<[1], [0], [0], [1], [0, 0, 1, 1], [], []>} : vector<8x4xbf16>, vector<4x288xbf16>, vector<8x288xf32> -> vector<8x288xf32>
    %108 = arith.addf %102, %107 : vector<8x288xf32>
    %c0_55 = arith.constant 0 : index
    %c0_56 = arith.constant 0 : index
    %c2_57 = arith.constant 2 : index
    %109 = vector.load %arg1[%c0_55, %c0_56, %c2_57] : memref<1x4x326xbf16, #tpu.memory_space<vmem>>, vector<1x4x288xbf16>
    %110 = vector.shape_cast %109 : vector<1x4x288xbf16> to vector<4x288xbf16>
    %111 = vector.extract_strided_slice %95 {offsets = [2, 0, 0], sizes = [1, 8, 4], strides = [1, 1, 1]} : vector<9x8x4xbf16> to vector<1x8x4xbf16>
    %112 = vector.shape_cast %111 : vector<1x8x4xbf16> to vector<8x4xbf16>
    %cst_58 = arith.constant dense<0.000000e+00> : vector<8x288xf32>
    %113 = tpu.matmul %112, %110, %cst_58 {dimension_numbers = #tpu.dot_dimension_numbers<[1], [0], [0], [1], [0, 0, 1, 1], [], []>} : vector<8x4xbf16>, vector<4x288xbf16>, vector<8x288xf32> -> vector<8x288xf32>
    %114 = arith.addf %108, %113 : vector<8x288xf32>
    %c0_59 = arith.constant 0 : index
    %c0_60 = arith.constant 0 : index
    %c18 = arith.constant 18 : index
    %115 = vector.load %arg1[%c0_59, %c0_60, %c18] : memref<1x4x326xbf16, #tpu.memory_space<vmem>>, vector<1x4x288xbf16>
    %116 = vector.shape_cast %115 : vector<1x4x288xbf16> to vector<4x288xbf16>
    %117 = vector.extract_strided_slice %95 {offsets = [3, 0, 0], sizes = [1, 8, 4], strides = [1, 1, 1]} : vector<9x8x4xbf16> to vector<1x8x4xbf16>
    %118 = vector.shape_cast %117 : vector<1x8x4xbf16> to vector<8x4xbf16>
    %cst_61 = arith.constant dense<0.000000e+00> : vector<8x288xf32>
    %119 = tpu.matmul %118, %116, %cst_61 {dimension_numbers = #tpu.dot_dimension_numbers<[1], [0], [0], [1], [0, 0, 1, 1], [], []>} : vector<8x4xbf16>, vector<4x288xbf16>, vector<8x288xf32> -> vector<8x288xf32>
    %120 = arith.addf %114, %119 : vector<8x288xf32>
    %c0_62 = arith.constant 0 : index
    %c0_63 = arith.constant 0 : index
    %c19 = arith.constant 19 : index
    %121 = vector.load %arg1[%c0_62, %c0_63, %c19] : memref<1x4x326xbf16, #tpu.memory_space<vmem>>, vector<1x4x288xbf16>
    %122 = vector.shape_cast %121 : vector<1x4x288xbf16> to vector<4x288xbf16>
    %123 = vector.extract_strided_slice %95 {offsets = [4, 0, 0], sizes = [1, 8, 4], strides = [1, 1, 1]} : vector<9x8x4xbf16> to vector<1x8x4xbf16>
    %124 = vector.shape_cast %123 : vector<1x8x4xbf16> to vector<8x4xbf16>
    %cst_64 = arith.constant dense<0.000000e+00> : vector<8x288xf32>
    %125 = tpu.matmul %124, %122, %cst_64 {dimension_numbers = #tpu.dot_dimension_numbers<[1], [0], [0], [1], [0, 0, 1, 1], [], []>} : vector<8x4xbf16>, vector<4x288xbf16>, vector<8x288xf32> -> vector<8x288xf32>
    %126 = arith.addf %120, %125 : vector<8x288xf32>
    %c0_65 = arith.constant 0 : index
    %c0_66 = arith.constant 0 : index
    %c20 = arith.constant 20 : index
    %127 = vector.load %arg1[%c0_65, %c0_66, %c20] : memref<1x4x326xbf16, #tpu.memory_space<vmem>>, vector<1x4x288xbf16>
    %128 = vector.shape_cast %127 : vector<1x4x288xbf16> to vector<4x288xbf16>
    %129 = vector.extract_strided_slice %95 {offsets = [5, 0, 0], sizes = [1, 8, 4], strides = [1, 1, 1]} : vector<9x8x4xbf16> to vector<1x8x4xbf16>
    %130 = vector.shape_cast %129 : vector<1x8x4xbf16> to vector<8x4xbf16>
    %cst_67 = arith.constant dense<0.000000e+00> : vector<8x288xf32>
    %131 = tpu.matmul %130, %128, %cst_67 {dimension_numbers = #tpu.dot_dimension_numbers<[1], [0], [0], [1], [0, 0, 1, 1], [], []>} : vector<8x4xbf16>, vector<4x288xbf16>, vector<8x288xf32> -> vector<8x288xf32>
    %132 = arith.addf %126, %131 : vector<8x288xf32>
    %c0_68 = arith.constant 0 : index
    %c0_69 = arith.constant 0 : index
    %c36 = arith.constant 36 : index
    %133 = vector.load %arg1[%c0_68, %c0_69, %c36] : memref<1x4x326xbf16, #tpu.memory_space<vmem>>, vector<1x4x288xbf16>
    %134 = vector.shape_cast %133 : vector<1x4x288xbf16> to vector<4x288xbf16>
    %135 = vector.extract_strided_slice %95 {offsets = [6, 0, 0], sizes = [1, 8, 4], strides = [1, 1, 1]} : vector<9x8x4xbf16> to vector<1x8x4xbf16>
    %136 = vector.shape_cast %135 : vector<1x8x4xbf16> to vector<8x4xbf16>
    %cst_70 = arith.constant dense<0.000000e+00> : vector<8x288xf32>
    %137 = tpu.matmul %136, %134, %cst_70 {dimension_numbers = #tpu.dot_dimension_numbers<[1], [0], [0], [1], [0, 0, 1, 1], [], []>} : vector<8x4xbf16>, vector<4x288xbf16>, vector<8x288xf32> -> vector<8x288xf32>
    %138 = arith.addf %132, %137 : vector<8x288xf32>
    %c0_71 = arith.constant 0 : index
    %c0_72 = arith.constant 0 : index
    %c37 = arith.constant 37 : index
    %139 = vector.load %arg1[%c0_71, %c0_72, %c37] : memref<1x4x326xbf16, #tpu.memory_space<vmem>>, vector<1x4x288xbf16>
    %140 = vector.shape_cast %139 : vector<1x4x288xbf16> to vector<4x288xbf16>
    %141 = vector.extract_strided_slice %95 {offsets = [7, 0, 0], sizes = [1, 8, 4], strides = [1, 1, 1]} : vector<9x8x4xbf16> to vector<1x8x4xbf16>
    %142 = vector.shape_cast %141 : vector<1x8x4xbf16> to vector<8x4xbf16>
    %cst_73 = arith.constant dense<0.000000e+00> : vector<8x288xf32>
    %143 = tpu.matmul %142, %140, %cst_73 {dimension_numbers = #tpu.dot_dimension_numbers<[1], [0], [0], [1], [0, 0, 1, 1], [], []>} : vector<8x4xbf16>, vector<4x288xbf16>, vector<8x288xf32> -> vector<8x288xf32>
    %144 = arith.addf %138, %143 : vector<8x288xf32>
    %c0_74 = arith.constant 0 : index
    %c0_75 = arith.constant 0 : index
    %c38 = arith.constant 38 : index
    %145 = vector.load %arg1[%c0_74, %c0_75, %c38] : memref<1x4x326xbf16, #tpu.memory_space<vmem>>, vector<1x4x288xbf16>
    %146 = vector.shape_cast %145 : vector<1x4x288xbf16> to vector<4x288xbf16>
    %147 = vector.extract_strided_slice %95 {offsets = [8, 0, 0], sizes = [1, 8, 4], strides = [1, 1, 1]} : vector<9x8x4xbf16> to vector<1x8x4xbf16>
    %148 = vector.shape_cast %147 : vector<1x8x4xbf16> to vector<8x4xbf16>
    %cst_76 = arith.constant dense<0.000000e+00> : vector<8x288xf32>
    %149 = tpu.matmul %148, %146, %cst_76 {dimension_numbers = #tpu.dot_dimension_numbers<[1], [0], [0], [1], [0, 0, 1, 1], [], []>} : vector<8x4xbf16>, vector<4x288xbf16>, vector<8x288xf32> -> vector<8x288xf32>
    %150 = arith.addf %144, %149 : vector<8x288xf32>
    %c0_77 = arith.constant 0 : index
    %c0_78 = arith.constant 0 : index
    %c0_79 = arith.constant 0 : index
    %151 = vector.load %arg6[%c0_77, %c0_78, %c0_79] : memref<1x8x288xf32, #tpu.memory_space<vmem>>, vector<1x8x288xf32>
    %152 = vector.shape_cast %151 : vector<1x8x288xf32> to vector<8x288xf32>
    %153 = vector.shape_cast %150 : vector<8x288xf32> to vector<1x8x288xf32>
    tpu.vector_store %arg6[%c0_77, %c0_78, %c0_79], %153 {strides = array<i32>} : memref<1x8x288xf32, #tpu.memory_space<vmem>>, vector<1x8x288xf32>,
    return
  }
  func.func @transform_0(%arg0: i32) -> (i32, i32, i32) {
    %c0_i32 = arith.constant 0 : i32
    %c0_i32_0 = arith.constant 0 : i32
    %c0_i32_1 = arith.constant 0 : i32
    return %arg0, %c0_i32, %c0_i32_0 : i32, i32, i32
  }
  func.func @transform_1(%arg0: i32) -> (i32, i32) {
    %c0_i32 = arith.constant 0 : i32
    %c0_i32_0 = arith.constant 0 : i32
    %c0_i32_1 = arith.constant 0 : i32
    return %c0_i32, %c0_i32_0 : i32, i32
  }
  func.func @transform_2(%arg0: i32) -> (i32, i32) {
    %c0_i32 = arith.constant 0 : i32
    %c0_i32_0 = arith.constant 0 : i32
    %c0_i32_1 = arith.constant 0 : i32
    return %c0_i32, %c0_i32_0 : i32, i32
  }
  func.func @transform_3(%arg0: i32) -> (i32, i32, i32, i32) {
    %c0_i32 = arith.constant 0 : i32
    %c0_i32_0 = arith.constant 0 : i32
    %c0_i32_1 = arith.constant 0 : i32
    %c0_i32_2 = arith.constant 0 : i32
    %c0_i32_3 = arith.constant 0 : i32
    return %c0_i32, %c0_i32_0, %c0_i32_1, %c0_i32_2 : i32, i32, i32, i32
  }
  func.func @transform_4(%arg0: i32) -> (i32, i32, i32, i32) {
    %c0_i32 = arith.constant 0 : i32
    %c0_i32_0 = arith.constant 0 : i32
    %c0_i32_1 = arith.constant 0 : i32
    %c0_i32_2 = arith.constant 0 : i32
    %c0_i32_3 = arith.constant 0 : i32
    return %c0_i32, %c0_i32_0, %c0_i32_1, %c0_i32_2 : i32, i32, i32, i32
  }
  func.func @transform_5(%arg0: i32) -> (i32, i32, i32) {
    %c0_i32 = arith.constant 0 : i32
    %c0_i32_0 = arith.constant 0 : i32
    %c0_i32_1 = arith.constant 0 : i32
    return %arg0, %c0_i32, %c0_i32_0 : i32, i32, i32
  }
}

</mosaic_0001>

<llo_original>
// kernel: tpu_custom_call.1
$region0: #{tpu_custom_call.1}
  #allocation0 [shape = 'u32[]', space=smem, size = 0x4, offset = 0x4, fixed_abs, tag = 'smem constant byte address 0x4 - core index']
  #allocation1 [shape = 'u32[144,128]{1,0:T(1,128)}', space=vmem, size = 0x12000, scoped, tag = 'internal scratch']
  %s0 = inlined_call_operand.vmem [shape: bf16[2,4,326], index: 0, kind: input, shape index: {}]
  %s1 = inlined_call_operand.vmem [shape: f32[4,8], index: 1, kind: input, shape index: {}]
  %s2 = inlined_call_operand.vmem [shape: f32[1,8], index: 2, kind: input, shape index: {}]
  %s3 = inlined_call_operand.vmem [shape: f32[4,9,8,4], index: 3, kind: input, shape index: {}]
  %s4 = inlined_call_operand.vmem [shape: f32[4,9,8,4], index: 4, kind: input, shape index: {}]
  %s5 = inlined_call_operand.hbm [shape: f32[2,8,288], index: 5, kind: output, shape index: {}]
  %s6 = sld [smem:[#allocation0]]
  $region53: #{tpu_custom_call.1} parent=0
    _
  %s8 = ssub.s32 1, %s6
  %s9 = scalar_select 0, %s8, %s6
  $region1: #{tpu_custom_call.1} parent=0
    #allocation2 [shape = 'u8[24576]{0}', space=vmem, size = 0x6000, scoped, tag = 'output window, operand 0']
    #allocation3 [shape = 's32[2]{0}', space=sflag, size = 0x8, scoped, tag = 'scoped memory for tpu_custom_call.1']
    %10 = vsyncpa [#allocation3], 0
    %s11 = scalar_lea.sflag [#allocation3], 1
    %12 = vsyncpa %s11, 0
    loop: start=0, step=1, limit=4
    $region2: #{tpu_custom_call.1} parent=1 // loop_pre_header
      _
    $region3: #{tpu_custom_call.1} parent=1 // loop_header
      %s14 = sphi 0, %s18
      %p15 = scmp.ge.s32.totalorder %s14, 4
      %s24 = sphi 0, %s26
      %s27 = sphi 0, %s24
      %s28 = sphi 0, %s27
      %s44 = sphi 0, %s28
      %s48 = sphi 0, %s48
      %s50 = sphi 0, %s48
      %s51 = sphi 0, %s50
      %s65 = sphi 0, %s51
      %s69 = sphi 0, %s69
      %s71 = sphi 0, %s69
      %s72 = sphi 0, %s71
      %s86 = sphi 0, %s72
      %s90 = sphi 0, %s90
      %s92 = sphi 0, %s90
      %s93 = sphi 0, %s92
      %s107 = sphi 0, %s93
      %s111 = sphi 0, %s111
      %s113 = sphi 0, %s111
      %s114 = sphi 0, %s113
      %s128 = sphi 0, %s114
      %s134 = sphi 0, %s136
      %s137 = sphi 0, %s134
      %s138 = sphi 0, %s137
      %s154 = sphi 0, %s138
    $region4: #{tpu_custom_call.1} parent=1 // loop_header_branch
      %17 = sbr.rel (%p15) target = $region8
    $region5: #{tpu_custom_call.1} parent=1 // loop_body
      %s19 = ssub.s32 %s14, 1
      %s20 = ssub.s32 %s14, 2
      %s21 = sadd.s32 %s14, 1
      %s22 = ssub.s32 %s14, %s21
      %p23 = scmp.eq.s32.totalorder %s22, 0
      %s25 = sadd.s32 %s24, 1
      %s26 = scalar_select %p23, %s24, %s25
      %p29 = pneg %p23
      %p30 = scmp.eq.s32.totalorder %s14, 1
      %p31 = por %p29, %p30
      %p32 = scmp.ne.s32.totalorder %s24, %s27
      %p33 = scmp.eq.s32.totalorder %s14, 0
      %p34 = por %p32, %p33
      %p35 = scmp.ne.s32.totalorder %s24, %s27
      %p36 = scmp.eq.s32.totalorder %s19, 1
      %p37 = por %p35, %p36
      %p38 = scmp.ne.s32.totalorder %s27, %s28
      %p39 = scmp.eq.s32.totalorder %s19, 0
      %p40 = por %p38, %p39
      %p41 = scmp.ne.s32.totalorder %s27, %s28
      %p42 = scmp.eq.s32.totalorder %s20, 1
      %p43 = por %p41, %p42
      %p45 = scmp.ne.s32.totalorder %s28, %s44
      %p46 = scmp.eq.s32.totalorder %s20, 0
      %p47 = por %p45, %p46
      %s49 = sadd.s32 %s48, 1
      %p52 = scmp.eq.s32.totalorder %s14, 1
      %p53 = scmp.ne.s32.totalorder %s48, %s50
      %p54 = scmp.eq.s32.totalorder %s14, 0
      %p55 = por %p53, %p54
      %p56 = scmp.ne.s32.totalorder %s48, %s50
      %p57 = scmp.eq.s32.totalorder %s19, 1
      %p58 = por %p56, %p57
      %p59 = scmp.ne.s32.totalorder %s50, %s51
      %p60 = scmp.eq.s32.totalorder %s19, 0
      %p61 = por %p59, %p60
      %p62 = scmp.ne.s32.totalorder %s50, %s51
      %p63 = scmp.eq.s32.totalorder %s20, 1
      %p64 = por %p62, %p63
      %p66 = scmp.ne.s32.totalorder %s51, %s65
      %p67 = scmp.eq.s32.totalorder %s20, 0
      %p68 = por %p66, %p67
      %s70 = sadd.s32 %s69, 1
      %p73 = scmp.eq.s32.totalorder %s14, 1
      %p74 = scmp.ne.s32.totalorder %s69, %s71
      %p75 = scmp.eq.s32.totalorder %s14, 0
      %p76 = por %p74, %p75
      %p77 = scmp.ne.s32.totalorder %s69, %s71
      %p78 = scmp.eq.s32.totalorder %s19, 1
      %p79 = por %p77, %p78
      %p80 = scmp.ne.s32.totalorder %s71, %s72
      %p81 = scmp.eq.s32.totalorder %s19, 0
      %p82 = por %p80, %p81
      %p83 = scmp.ne.s32.totalorder %s71, %s72
      %p84 = scmp.eq.s32.totalorder %s20, 1
      %p85 = por %p83, %p84
      %p87 = scmp.ne.s32.totalorder %s72, %s86
      %p88 = scmp.eq.s32.totalorder %s20, 0
      %p89 = por %p87, %p88
      %s91 = sadd.s32 %s90, 1
      %p94 = scmp.eq.s32.totalorder %s14, 1
      %p95 = scmp.ne.s32.totalorder %s90, %s92
      %p96 = scmp.eq.s32.totalorder %s14, 0
      %p97 = por %p95, %p96
      %p98 = scmp.ne.s32.totalorder %s90, %s92
      %p99 = scmp.eq.s32.totalorder %s19, 1
      %p100 = por %p98, %p99
      %p101 = scmp.ne.s32.totalorder %s92, %s93
      %p102 = scmp.eq.s32.totalorder %s19, 0
      %p103 = por %p101, %p102
      %p104 = scmp.ne.s32.totalorder %s92, %s93
      %p105 = scmp.eq.s32.totalorder %s20, 1
      %p106 = por %p104, %p105
      %p108 = scmp.ne.s32.totalorder %s93, %s107
      %p109 = scmp.eq.s32.totalorder %s20, 0
      %p110 = por %p108, %p109
      %s112 = sadd.s32 %s111, 1
      %p115 = scmp.eq.s32.totalorder %s14, 1
      %p116 = scmp.ne.s32.totalorder %s111, %s113
      %p117 = scmp.eq.s32.totalorder %s14, 0
      %p118 = por %p116, %p117
      %p119 = scmp.ne.s32.totalorder %s111, %s113
      %p120 = scmp.eq.s32.totalorder %s19, 1
      %p121 = por %p119, %p120
      %p122 = scmp.ne.s32.totalorder %s113, %s114
      %p123 = scmp.eq.s32.totalorder %s19, 0
      %p124 = por %p122, %p123
      %p125 = scmp.ne.s32.totalorder %s113, %s114
      %p126 = scmp.eq.s32.totalorder %s20, 1
      %p127 = por %p125, %p126
      %p129 = scmp.ne.s32.totalorder %s114, %s128
      %p130 = scmp.eq.s32.totalorder %s20, 0
      %p131 = por %p129, %p130
      %s132 = ssub.s32 %s14, %s21
      %p133 = scmp.eq.s32.totalorder %s132, 0
      %s135 = sadd.s32 %s134, 1
      %s136 = scalar_select %p133, %s134, %s135
      %p139 = pneg %p133
      %p140 = scmp.eq.s32.totalorder %s14, 1
      %p141 = por %p139, %p140
      %p142 = scmp.ne.s32.totalorder %s134, %s137
      %p143 = scmp.eq.s32.totalorder %s14, 0
      %p144 = por %p142, %p143
      %p145 = scmp.ne.s32.totalorder %s134, %s137
      %p146 = scmp.eq.s32.totalorder %s19, 1
      %p147 = por %p145, %p146
      %p148 = scmp.ne.s32.totalorder %s137, %s138
      %p149 = scmp.eq.s32.totalorder %s19, 0
      %p150 = por %p148, %p149
      %p151 = scmp.ne.s32.totalorder %s137, %s138
      %p152 = scmp.eq.s32.totalorder %s20, 1
      %p153 = por %p151, %p152
      %p155 = scmp.ne.s32.totalorder %s138, %s154
      %p156 = scmp.eq.s32.totalorder %s20, 0
      %p157 = por %p155, %p156
      %p158 = scmp.le.s32.totalorder 1, %s14
      %p159 = scmp.lt.s32.totalorder %s14, 3
      %p160 = pnand %p158, %p159
      %p161 = pneg %p160
      // Predicated region
      $region9: #{tpu_custom_call.1} parent=5 // pred_check
        _
      $region10: #{tpu_custom_call.1} parent=5 // pred_check_branch
        %163 = sbr.rel (%p160) target = $region12
      $region11: #{tpu_custom_call.1} parent=5 // pred_region
        %s164 = ssub.s32 %s14, 1
        // Predicated region
        $region13: #{tpu_custom_call.1} parent=11 // pred_check
          %p165 = pneg %p61
        $region14: #{tpu_custom_call.1} parent=11 // pred_check_branch
          %167 = sbr.rel (%p165) target = $region16
        $region15: #{tpu_custom_call.1} parent=11 // pred_region
          _
        $region16: #{tpu_custom_call.1} parent=11 // pred_fallthru
          _
        // Predicated region
        $region17: #{tpu_custom_call.1} parent=11 // pred_check
          %p168 = pneg %p82
        $region18: #{tpu_custom_call.1} parent=11 // pred_check_branch
          %170 = sbr.rel (%p168) target = $region20
        $region19: #{tpu_custom_call.1} parent=11 // pred_region
          _
        $region20: #{tpu_custom_call.1} parent=11 // pred_fallthru
          _
        // Predicated region
        $region21: #{tpu_custom_call.1} parent=11 // pred_check
          %p171 = pneg %p103
        $region22: #{tpu_custom_call.1} parent=11 // pred_check_branch
          %173 = sbr.rel (%p171) target = $region24
        $region23: #{tpu_custom_call.1} parent=11 // pred_region
          _
        $region24: #{tpu_custom_call.1} parent=11 // pred_fallthru
          _
        // Predicated region
        $region25: #{tpu_custom_call.1} parent=11 // pred_check
          %p174 = pneg %p124
        $region26: #{tpu_custom_call.1} parent=11 // pred_check_branch
          %176 = sbr.rel (%p174) target = $region28
        $region27: #{tpu_custom_call.1} parent=11 // pred_region
          _
        $region28: #{tpu_custom_call.1} parent=11 // pred_fallthru
          _
      $region12: #{tpu_custom_call.1} parent=5 // pred_fallthru
        _
      %p177 = scmp.lt.s32.totalorder %s14, 2
      // Predicated region
      $region29: #{tpu_custom_call.1} parent=5 // pred_check
        %p178 = pneg %p177
      $region30: #{tpu_custom_call.1} parent=5 // pred_check_branch
        %180 = sbr.rel (%p178) target = $region32
      $region31: #{tpu_custom_call.1} parent=5 // pred_region
        // Predicated region
        $region33: #{tpu_custom_call.1} parent=31 // pred_check
          %p181 = pneg %p34
        $region34: #{tpu_custom_call.1} parent=31 // pred_check_branch
          %183 = sbr.rel (%p181) target = $region36
        $region35: #{tpu_custom_call.1} parent=31 // pred_region
          %p184 = scmp.lt.s32.totalorder %s14, 1
          %s185 = scalar_select %p184, %s14, 1
          %s186 = smul.addr %s185, 3
          %s187 = smul.addr %s186, 2
          %s188 = scalar_lea.vmem %s0, %s187
        $region36: #{tpu_custom_call.1} parent=31 // pred_fallthru
          _
      $region32: #{tpu_custom_call.1} parent=5 // pred_fallthru
        _
      %p189 = scmp.le.s32.totalorder 1, %s14
      %p190 = scmp.lt.s32.totalorder %s14, 3
      %p191 = pnand %p189, %p190
      %p192 = pneg %p191
      // Predicated region
      $region37: #{tpu_custom_call.1} parent=5 // pred_check
        _
      $region38: #{tpu_custom_call.1} parent=5 // pred_check_branch
        %194 = sbr.rel (%p191) target = $region40
      $region39: #{tpu_custom_call.1} parent=5 // pred_region
        %s195 = ssub.s32 %s14, 1
        %p196 = scmp.lt.s32.totalorder %s19, 1
        %s197 = scalar_select %p196, %s19, 1
        %s198 = smul.addr %s197, 3
        %s199 = smul.addr %s198, 2
        %s200 = scalar_lea.vmem %s0, %s199
        %p201 = pneg %p40
        %p202 = pneg %p37
        %p203 = pneg %p61
        %p204 = pneg %p58
        %p205 = pneg %p82
        %p206 = pneg %p79
        %p207 = pneg %p103
        %p208 = pneg %p100
        %p209 = pneg %p124
        %p210 = pneg %p121
        %p211 = pneg %p150
        %p212 = pneg %p147
        %s213 = sand.u32 %s137, 1
        %s214 = scalar_lea.sflag [#allocation3], %s213
        %s215 = sand.u32 %s137, 1
        %s216 = smul.addr %s215, 24
        %s217 = scalar_lea.vmem [#allocation2], %s216
        %p218 = scmp.lt.s32.totalorder %s19, 1
        %s219 = scalar_select %p218, %s19, 1
        %s220 = smul.addr %s219, 3
        %s221 = smul.addr %s220, 2
        %s222 = scalar_lea.vmem %s0, %s221
        %v224 = vld [vmem:[%s222] sm:$0x3f]
        %v225 = vunpack.c.l.bf16 %v224
        %v226 = vunpack.c.h.bf16 %v224
        %v228 = vcombine.high %v225, %v225
        %vm230 = vcmask 1043456
        %v231 = vsel %vm230, %v225, 0.0
        %v232 = vsel %vm230, %v228, 0.0
        %v233 = vadd.f32 %v231, %v232
        %vm234 = vcmask 568320
        %v235 = vsel %vm234, %v226, 0.0
        %v236 = vadd.f32 %v233, %v235
        %237 = vadd.xlane.f32.xlu0 %v236
        %v238 = vpop.xlane.xlu0 %237
        %v239 = vmul.f32 %v238, 0.00390625
        %v240 = vld [vmem:[%s1] sm:$0xf]
        %v241 = vld [vmem:[%s2] sm:$0x1]
        %v243 = vlaneseq
        %v244 = vand.u32 %v243, 127
        %v245 = vlaneseq
        %v246 = vshrl.u32 %v245, 7
        %v247 = vsub.s32 %v244, %v246
        %v248 = vrot.slane %v239, %v247
        %vm249 = vcmask 31744
        %v250 = vsel %vm249, %v248, 0
        %v253 = vsel %vm230, %v240, 0
        %255 = vmatprep.subr.mxu0 0.0
        %256 = vmatpush1.msra.mxu0 %v253
        %257 = vmatprep.subr.mxu0 0.0
        %258 = vmatpush1.msra.mxu0 0.0
        %259 = vmatprep.subr.mxu0 0.0
        %260 = vmatpush1.msra.mxu0 0.0
        %261 = vmatprep.subr.mxu0 0.0
        %262 = vmatpush1.msra.mxu0 0.0
        %263 = vmatprep.subr.mxu0 0.0
        %264 = vmatpush1.msra.mxu0 0.0
        %265 = vmatprep.subr.mxu0 0.0
        %266 = vmatpush1.msra.mxu0 0.0
        %267 = vmatprep.subr.mxu0 0.0
        %268 = vmatpush1.msra.mxu0 0.0
        %269 = vmatprep.subr.mxu0 0.0
        %270 = vmatpush1.msra.mxu0 0.0
        %271 = vmatprep.subr.mxu0 0.0
        %272 = vmatpush1.msra.mxu0 0.0
        %273 = vmatprep.subr.mxu0 0.0
        %274 = vmatpush1.msra.mxu0 0.0
        %275 = vmatprep.subr.mxu0 0.0
        %276 = vmatpush1.msra.mxu0 0.0
        %277 = vmatprep.subr.mxu0 0.0
        %278 = vmatpush1.msra.mxu0 0.0
        %279 = vmatprep.subr.mxu0 0.0
        %280 = vmatpush1.msra.mxu0 0.0
        %281 = vmatprep.subr.mxu0 0.0
        %282 = vmatpush1.msra.mxu0 0.0
        %283 = vmatprep.subr.mxu0 0.0
        %284 = vmatpush1.msra.mxu0 0.0
        %285 = vmatprep.subr.mxu0 0.0
        %286 = vmatpush1.msra.mxu0 0.0
        %287 = vmatprep.subr.mxu0 0.0
        %288 = vmatpush1.msra.mxu0 0.0
        %289 = vmatprep.subr.mxu0 0.0
        %290 = vmatpush1.msra.mxu0 0.0
        %291 = vmatprep.subr.mxu0 0.0
        %292 = vmatpush1.msra.mxu0 0.0
        %293 = vmatprep.subr.mxu0 0.0
        %294 = vmatpush1.msra.mxu0 0.0
        %295 = vmatprep.subr.mxu0 0.0
        %296 = vmatpush1.msra.mxu0 0.0
        %297 = vmatprep.subr.mxu0 0.0
        %298 = vmatpush1.msra.mxu0 0.0
        %299 = vmatprep.subr.mxu0 0.0
        %300 = vmatpush1.msra.mxu0 0.0
        %301 = vmatprep.subr.mxu0 0.0
        %302 = vmatpush1.msra.mxu0 0.0
        %303 = vmatprep.subr.mxu0 0.0
        %304 = vmatpush1.msra.mxu0 0.0
        %305 = vmatprep.subr.mxu0 0.0
        %306 = vmatpush1.msra.mxu0 0.0
        %307 = vmatprep.subr.mxu0 0.0
        %308 = vmatpush1.msra.mxu0 0.0
        %309 = vmatprep.subr.mxu0 0.0
        %310 = vmatpush1.msra.mxu0 0.0
        %311 = vmatprep.subr.mxu0 0.0
        %312 = vmatpush1.msra.mxu0 0.0
        %313 = vmatprep.subr.mxu0 0.0
        %314 = vmatpush1.msra.mxu0 0.0
        %315 = vmatprep.subr.mxu0 0.0
        %316 = vmatpush1.msra.mxu0 0.0
        %317 = vmatprep.subr.mxu0 0.0
        %318 = vmatpush1.msra.mxu0 0.0
        %319 = vmatprep.mubr.f32.mxu0 0.0
        %320 = vmatmul.mubr.f32.gmra.mrb[0].mxu0 %v250
        %v321 = vpop.f32.mrb[0].mxu0
        %v322 = vadd.f32 %v241, %v321
        %v323 = vpop.f32.mrb[0].mxu0
        %324 = vdwg.mxu0
        %v325 = vxor.u32 %v322, 2147483648
        %v326 = vmul.f32 %v325, 1.442695
        %v327 = vpow.pop %v326
        %v328 = vadd.f32 %v327, 1.0
        %v329 = vrcp.pop %v328
        %v330 = vmul.f32 1.0, %v329
        %v331 = vsub.f32 1.0, %v330
        %333 = vrot.lane.b32.xlu0 %v331, 124
        %v334 = vpop.permute.xlu0 %333
        %v336 = vmul.f32 %v330, %v334
        %338 = vrot.lane.b32.xlu0 %v330, 124
        %v339 = vpop.permute.xlu0 %338
        %v341 = vmul.f32 %v330, %v339
        %v342 = vld [vmem:[%s3] sm:$0xff]
        %v343 = vld [vmem:[%s3 + $0x8] sm:$0xff]
        %v344 = vld [vmem:[%s3 + $0x10] sm:$0xff]
        %v345 = vld [vmem:[%s3 + $0x18] sm:$0xff]
        %v346 = vld [vmem:[%s3 + $0x20] sm:$0xff]
        %v347 = vld [vmem:[%s3 + $0x28] sm:$0xff]
        %v348 = vld [vmem:[%s3 + $0x30] sm:$0xff]
        %v349 = vld [vmem:[%s3 + $0x38] sm:$0xff]
        %v350 = vld [vmem:[%s3 + $0x40] sm:$0xff]
        %s352 = vtos %v336
        %v353 = vstv %s352
        %v355 = vmul.f32 %v353, %v342
        %v356 = vmul.f32 %v353, %v343
        %v357 = vmul.f32 %v353, %v344
        %v358 = vmul.f32 %v353, %v345
        %v359 = vmul.f32 %v353, %v346
        %v360 = vmul.f32 %v353, %v347
        %v361 = vmul.f32 %v353, %v348
        %v362 = vmul.f32 %v353, %v349
        %v363 = vmul.f32 %v353, %v350
        %v364 = vld [vmem:[%s4] sm:$0xff]
        %v365 = vld [vmem:[%s4 + $0x8] sm:$0xff]
        %v366 = vld [vmem:[%s4 + $0x10] sm:$0xff]
        %v367 = vld [vmem:[%s4 + $0x18] sm:$0xff]
        %v368 = vld [vmem:[%s4 + $0x20] sm:$0xff]
        %v369 = vld [vmem:[%s4 + $0x28] sm:$0xff]
        %v370 = vld [vmem:[%s4 + $0x30] sm:$0xff]
        %v371 = vld [vmem:[%s4 + $0x38] sm:$0xff]
        %v372 = vld [vmem:[%s4 + $0x40] sm:$0xff]
        %s374 = vtos %v341
        %v375 = vstv %s374
        %v377 = vmul.f32 %v375, %v364
        %v378 = vmul.f32 %v375, %v365
        %v379 = vmul.f32 %v375, %v366
        %v380 = vmul.f32 %v375, %v367
        %v381 = vmul.f32 %v375, %v368
        %v382 = vmul.f32 %v375, %v369
        %v383 = vmul.f32 %v375, %v370
        %v384 = vmul.f32 %v375, %v371
        %v385 = vmul.f32 %v375, %v372
        %v386 = vadd.f32 %v355, %v377
        %v387 = vadd.f32 %v356, %v378
        %v388 = vadd.f32 %v357, %v379
        %v389 = vadd.f32 %v358, %v380
        %v390 = vadd.f32 %v359, %v381
        %v391 = vadd.f32 %v360, %v382
        %v392 = vadd.f32 %v361, %v383
        %v393 = vadd.f32 %v362, %v384
        %v394 = vadd.f32 %v363, %v385
        %s395 = scalar_lea.vmem %s3, 72
        %v396 = vld [vmem:[%s395] sm:$0xff]
        %v397 = vld [vmem:[%s395 + $0x8] sm:$0xff]
        %v398 = vld [vmem:[%s395 + $0x10] sm:$0xff]
        %v399 = vld [vmem:[%s395 + $0x18] sm:$0xff]
        %v400 = vld [vmem:[%s395 + $0x20] sm:$0xff]
        %v401 = vld [vmem:[%s395 + $0x28] sm:$0xff]
        %v402 = vld [vmem:[%s395 + $0x30] sm:$0xff]
        %v403 = vld [vmem:[%s395 + $0x38] sm:$0xff]
        %v404 = vld [vmem:[%s395 + $0x40] sm:$0xff]
        %405 = vrot.lane.b32.xlu0 %v336, 127
        %v406 = vpop.permute.xlu0 %405
        %s407 = vtos %v406
        %v408 = vstv %s407
        %v410 = vmul.f32 %v408, %v396
        %v411 = vmul.f32 %v408, %v397
        %v412 = vmul.f32 %v408, %v398
        %v413 = vmul.f32 %v408, %v399
        %v414 = vmul.f32 %v408, %v400
        %v415 = vmul.f32 %v408, %v401
        %v416 = vmul.f32 %v408, %v402
        %v417 = vmul.f32 %v408, %v403
        %v418 = vmul.f32 %v408, %v404
        %s419 = scalar_lea.vmem %s4, 72
        %v420 = vld [vmem:[%s419] sm:$0xff]
        %v421 = vld [vmem:[%s419 + $0x8] sm:$0xff]
        %v422 = vld [vmem:[%s419 + $0x10] sm:$0xff]
        %v423 = vld [vmem:[%s419 + $0x18] sm:$0xff]
        %v424 = vld [vmem:[%s419 + $0x20] sm:$0xff]
        %v425 = vld [vmem:[%s419 + $0x28] sm:$0xff]
        %v426 = vld [vmem:[%s419 + $0x30] sm:$0xff]
        %v427 = vld [vmem:[%s419 + $0x38] sm:$0xff]
        %v428 = vld [vmem:[%s419 + $0x40] sm:$0xff]
        %429 = vrot.lane.b32.xlu0 %v341, 127
        %v430 = vpop.permute.xlu0 %429
        %s431 = vtos %v430
        %v432 = vstv %s431
        %v434 = vmul.f32 %v432, %v420
        %v435 = vmul.f32 %v432, %v421
        %v436 = vmul.f32 %v432, %v422
        %v437 = vmul.f32 %v432, %v423
        %v438 = vmul.f32 %v432, %v424
        %v439 = vmul.f32 %v432, %v425
        %v440 = vmul.f32 %v432, %v426
        %v441 = vmul.f32 %v432, %v427
        %v442 = vmul.f32 %v432, %v428
        %v443 = vadd.f32 %v410, %v434
        %v444 = vadd.f32 %v411, %v435
        %v445 = vadd.f32 %v412, %v436
        %v446 = vadd.f32 %v413, %v437
        %v447 = vadd.f32 %v414, %v438
        %v448 = vadd.f32 %v415, %v439
        %v449 = vadd.f32 %v416, %v440
        %v450 = vadd.f32 %v417, %v441
        %v451 = vadd.f32 %v418, %v442
        %v452 = vadd.f32 %v386, %v443
        %v453 = vadd.f32 %v387, %v444
        %v454 = vadd.f32 %v388, %v445
        %v455 = vadd.f32 %v389, %v446
        %v456 = vadd.f32 %v390, %v447
        %v457 = vadd.f32 %v391, %v448
        %v458 = vadd.f32 %v392, %v449
        %v459 = vadd.f32 %v393, %v450
        %v460 = vadd.f32 %v394, %v451
        %s461 = scalar_lea.vmem %s3, 144
        %v462 = vld [vmem:[%s461] sm:$0xff]
        %v463 = vld [vmem:[%s461 + $0x8] sm:$0xff]
        %v464 = vld [vmem:[%s461 + $0x10] sm:$0xff]
        %v465 = vld [vmem:[%s461 + $0x18] sm:$0xff]
        %v466 = vld [vmem:[%s461 + $0x20] sm:$0xff]
        %v467 = vld [vmem:[%s461 + $0x28] sm:$0xff]
        %v468 = vld [vmem:[%s461 + $0x30] sm:$0xff]
        %v469 = vld [vmem:[%s461 + $0x38] sm:$0xff]
        %v470 = vld [vmem:[%s461 + $0x40] sm:$0xff]
        %471 = vrot.lane.b32.xlu0 %v336, 126
        %v472 = vpop.permute.xlu0 %471
        %s473 = vtos %v472
        %v474 = vstv %s473
        %v476 = vmul.f32 %v474, %v462
        %v477 = vmul.f32 %v474, %v463
        %v478 = vmul.f32 %v474, %v464
        %v479 = vmul.f32 %v474, %v465
        %v480 = vmul.f32 %v474, %v466
        %v481 = vmul.f32 %v474, %v467
        %v482 = vmul.f32 %v474, %v468
        %v483 = vmul.f32 %v474, %v469
        %v484 = vmul.f32 %v474, %v470
        %s485 = scalar_lea.vmem %s4, 144
        %v486 = vld [vmem:[%s485] sm:$0xff]
        %v487 = vld [vmem:[%s485 + $0x8] sm:$0xff]
        %v488 = vld [vmem:[%s485 + $0x10] sm:$0xff]
        %v489 = vld [vmem:[%s485 + $0x18] sm:$0xff]
        %v490 = vld [vmem:[%s485 + $0x20] sm:$0xff]
        %v491 = vld [vmem:[%s485 + $0x28] sm:$0xff]
        %v492 = vld [vmem:[%s485 + $0x30] sm:$0xff]
        %v493 = vld [vmem:[%s485 + $0x38] sm:$0xff]
        %v494 = vld [vmem:[%s485 + $0x40] sm:$0xff]
        %495 = vrot.lane.b32.xlu0 %v341, 126
        %v496 = vpop.permute.xlu0 %495
        %s497 = vtos %v496
        %v498 = vstv %s497
        %v500 = vmul.f32 %v498, %v486
        %v501 = vmul.f32 %v498, %v487
        %v502 = vmul.f32 %v498, %v488
        %v503 = vmul.f32 %v498, %v489
        %v504 = vmul.f32 %v498, %v490
        %v505 = vmul.f32 %v498, %v491
        %v506 = vmul.f32 %v498, %v492
        %v507 = vmul.f32 %v498, %v493
        %v508 = vmul.f32 %v498, %v494
        %v509 = vadd.f32 %v476, %v500
        %v510 = vadd.f32 %v477, %v501
        %v511 = vadd.f32 %v478, %v502
        %v512 = vadd.f32 %v479, %v503
        %v513 = vadd.f32 %v480, %v504
        %v514 = vadd.f32 %v481, %v505
        %v515 = vadd.f32 %v482, %v506
        %v516 = vadd.f32 %v483, %v507
        %v517 = vadd.f32 %v484, %v508
        %v518 = vadd.f32 %v452, %v509
        %v519 = vadd.f32 %v453, %v510
        %v520 = vadd.f32 %v454, %v511
        %v521 = vadd.f32 %v455, %v512
        %v522 = vadd.f32 %v456, %v513
        %v523 = vadd.f32 %v457, %v514
        %v524 = vadd.f32 %v458, %v515
        %v525 = vadd.f32 %v459, %v516
        %v526 = vadd.f32 %v460, %v517
        %s527 = scalar_lea.vmem %s3, 216
        %v528 = vld [vmem:[%s527] sm:$0xff]
        %v529 = vld [vmem:[%s527 + $0x8] sm:$0xff]
        %v530 = vld [vmem:[%s527 + $0x10] sm:$0xff]
        %v531 = vld [vmem:[%s527 + $0x18] sm:$0xff]
        %v532 = vld [vmem:[%s527 + $0x20] sm:$0xff]
        %v533 = vld [vmem:[%s527 + $0x28] sm:$0xff]
        %v534 = vld [vmem:[%s527 + $0x30] sm:$0xff]
        %v535 = vld [vmem:[%s527 + $0x38] sm:$0xff]
        %v536 = vld [vmem:[%s527 + $0x40] sm:$0xff]
        %537 = vrot.lane.b32.xlu0 %v336, 125
        %v538 = vpop.permute.xlu0 %537
        %s539 = vtos %v538
        %v540 = vstv %s539
        %v542 = vmul.f32 %v540, %v528
        %v543 = vmul.f32 %v540, %v529
        %v544 = vmul.f32 %v540, %v530
        %v545 = vmul.f32 %v540, %v531
        %v546 = vmul.f32 %v540, %v532
        %v547 = vmul.f32 %v540, %v533
        %v548 = vmul.f32 %v540, %v534
        %v549 = vmul.f32 %v540, %v535
        %v550 = vmul.f32 %v540, %v536
        %s551 = scalar_lea.vmem %s4, 216
        %v552 = vld [vmem:[%s551] sm:$0xff]
        %v553 = vld [vmem:[%s551 + $0x8] sm:$0xff]
        %v554 = vld [vmem:[%s551 + $0x10] sm:$0xff]
        %v555 = vld [vmem:[%s551 + $0x18] sm:$0xff]
        %v556 = vld [vmem:[%s551 + $0x20] sm:$0xff]
        %v557 = vld [vmem:[%s551 + $0x28] sm:$0xff]
        %v558 = vld [vmem:[%s551 + $0x30] sm:$0xff]
        %v559 = vld [vmem:[%s551 + $0x38] sm:$0xff]
        %v560 = vld [vmem:[%s551 + $0x40] sm:$0xff]
        %561 = vrot.lane.b32.xlu0 %v341, 125
        %v562 = vpop.permute.xlu0 %561
        %s563 = vtos %v562
        %v564 = vstv %s563
        %v566 = vmul.f32 %v564, %v552
        %v567 = vmul.f32 %v564, %v553
        %v568 = vmul.f32 %v564, %v554
        %v569 = vmul.f32 %v564, %v555
        %v570 = vmul.f32 %v564, %v556
        %v571 = vmul.f32 %v564, %v557
        %v572 = vmul.f32 %v564, %v558
        %v573 = vmul.f32 %v564, %v559
        %v574 = vmul.f32 %v564, %v560
        %v575 = vadd.f32 %v542, %v566
        %v576 = vadd.f32 %v543, %v567
        %v577 = vadd.f32 %v544, %v568
        %v578 = vadd.f32 %v545, %v569
        %v579 = vadd.f32 %v546, %v570
        %v580 = vadd.f32 %v547, %v571
        %v581 = vadd.f32 %v548, %v572
        %v582 = vadd.f32 %v549, %v573
        %v583 = vadd.f32 %v550, %v574
        %v584 = vadd.f32 %v518, %v575
        %v585 = vadd.f32 %v519, %v576
        %v586 = vadd.f32 %v520, %v577
        %v587 = vadd.f32 %v521, %v578
        %v588 = vadd.f32 %v522, %v579
        %v589 = vadd.f32 %v523, %v580
        %v590 = vadd.f32 %v524, %v581
        %v591 = vadd.f32 %v525, %v582
        %v592 = vadd.f32 %v526, %v583
        %v593 = vpack.c.bf16 %v584, %v584
        %v594 = vpack.c.bf16 %v585, %v585
        %v595 = vpack.c.bf16 %v586, %v586
        %v596 = vpack.c.bf16 %v587, %v587
        %v597 = vpack.c.bf16 %v588, %v588
        %v598 = vpack.c.bf16 %v589, %v589
        %v599 = vpack.c.bf16 %v590, %v590
        %v600 = vpack.c.bf16 %v591, %v591
        %v601 = vpack.c.bf16 %v592, %v592
        %v602 = vld [vmem:[%s222] sm:$0x3f]
        %v604 = vcombine.high %v602, %v602
        %v606 = vunpack.c.l.s4 1983009808
        %v607 = vunpack.c.0.s8 %v606
        %v608 = vlaneseq
        %v609 = vshrl.u32 %v608, 7
        %v610 = vsub.s32 %v607, %v609
        %v611 = vrot.slane %v602, %v610
        %v613 = vunpack.c.l.s4 1983009808
        %v614 = vunpack.c.0.s8 %v613
        %v615 = vlaneseq
        %v616 = vshrl.u32 %v615, 7
        %v617 = vsub.s32 %v614, %v616
        %v618 = vrot.slane %v604, %v617
        %v619 = vcombine.high %v611, %v611
        %620 = vrot.lane.b32.xlu0 %v611, 127
        %v621 = vpop.permute.xlu0 %620
        %622 = vrot.lane.b32.xlu0 %v619, 127
        %v623 = vpop.permute.xlu0 %622
        %624 = vrot.lane.b32.xlu0 %v618, 127
        %v625 = vpop.permute.xlu0 %624
        %vm626 = vcmask 1039360
        %v627 = vsel %vm626, %v621, %v623
        %v628 = vsel %vm626, %v623, %v625
        %v630 = vsel %vm249, %v594, 0
        %vm632 = vcmask 1041408
        %v634 = vsel %vm632, %v627, 0
        %v637 = vsel %vm632, %v628, 0
        %v640 = vsel %vm632, %v625, 0
        %642 = vmatprep.subr.bf16.mxu0 %v637
        %643 = vmatpush1.bf16.msra.mxu0 %v634
        %644 = vmatprep.subr.bf16.mxu0 0
        %645 = vmatpush1.bf16.msra.mxu0 0
        %646 = vmatprep.subr.bf16.mxu0 0
        %647 = vmatpush1.bf16.msra.mxu0 0
        %648 = vmatprep.subr.bf16.mxu0 0
        %649 = vmatpush1.bf16.msra.mxu0 0
        %650 = vmatprep.subr.bf16.mxu0 0
        %651 = vmatpush1.bf16.msra.mxu0 0
        %652 = vmatprep.subr.bf16.mxu0 0
        %653 = vmatpush1.bf16.msra.mxu0 0
        %654 = vmatprep.subr.bf16.mxu0 0
        %655 = vmatpush1.bf16.msra.mxu0 0
        %656 = vmatprep.subr.bf16.mxu0 0
        %657 = vmatpush1.bf16.msra.mxu0 0
        %658 = vmatprep.subr.bf16.mxu0 0
        %659 = vmatpush1.bf16.msra.mxu0 0
        %660 = vmatprep.subr.bf16.mxu0 0
        %661 = vmatpush1.bf16.msra.mxu0 0
        %662 = vmatprep.subr.bf16.mxu0 0
        %663 = vmatpush1.bf16.msra.mxu0 0
        %664 = vmatprep.subr.bf16.mxu0 0
        %665 = vmatpush1.bf16.msra.mxu0 0
        %666 = vmatprep.subr.bf16.mxu0 0
        %667 = vmatpush1.bf16.msra.mxu0 0
        %668 = vmatprep.subr.bf16.mxu0 0
        %669 = vmatpush1.bf16.msra.mxu0 0
        %670 = vmatprep.subr.bf16.mxu0 0
        %671 = vmatpush1.bf16.msra.mxu0 0
        %672 = vmatprep.subr.bf16.mxu0 0
        %673 = vmatpush1.bf16.msra.mxu0 0
        %674 = vmatprep.mubr.bf16.mxu0 0
        %675 = vmatmul.mubr.bf16.gmra.mrb[0].mxu0 %v630
        %v676 = vpop.f32.mrb[0].mxu0
        %v677 = vadd.f32 0.0, %v676
        %v678 = vpop.f32.mrb[0].mxu0
        %v679 = vadd.f32 0.0, %v678
        %v680 = vpop.f32.mrb[0].mxu0
        %v681 = vpop.f32.mrb[0].mxu0
        %682 = vdwg.mxu0
        %683 = vmatprep.subr.bf16.mxu0 0
        %684 = vmatpush1.bf16.msra.mxu0 %v640
        %685 = vmatprep.subr.bf16.mxu0 0
        %686 = vmatpush1.bf16.msra.mxu0 0
        %687 = vmatprep.subr.bf16.mxu0 0
        %688 = vmatpush1.bf16.msra.mxu0 0
        %689 = vmatprep.subr.bf16.mxu0 0
        %690 = vmatpush1.bf16.msra.mxu0 0
        %691 = vmatprep.subr.bf16.mxu0 0
        %692 = vmatpush1.bf16.msra.mxu0 0
        %693 = vmatprep.subr.bf16.mxu0 0
        %694 = vmatpush1.bf16.msra.mxu0 0
        %695 = vmatprep.subr.bf16.mxu0 0
        %696 = vmatpush1.bf16.msra.mxu0 0
        %697 = vmatprep.subr.bf16.mxu0 0
        %698 = vmatpush1.bf16.msra.mxu0 0
        %699 = vmatprep.subr.bf16.mxu0 0
        %700 = vmatpush1.bf16.msra.mxu0 0
        %701 = vmatprep.subr.bf16.mxu0 0
        %702 = vmatpush1.bf16.msra.mxu0 0
        %703 = vmatprep.subr.bf16.mxu0 0
        %704 = vmatpush1.bf16.msra.mxu0 0
        %705 = vmatprep.subr.bf16.mxu0 0
        %706 = vmatpush1.bf16.msra.mxu0 0
        %707 = vmatprep.subr.bf16.mxu0 0
        %708 = vmatpush1.bf16.msra.mxu0 0
        %709 = vmatprep.subr.bf16.mxu0 0
        %710 = vmatpush1.bf16.msra.mxu0 0
        %711 = vmatprep.subr.bf16.mxu0 0
        %712 = vmatpush1.bf16.msra.mxu0 0
        %713 = vmatprep.subr.bf16.mxu0 0
        %714 = vmatpush1.bf16.msra.mxu0 0
        %715 = vmatprep.mubr.bf16.mxu0 0
        %716 = vmatmul.mubr.bf16.gmra.mrb[0].mxu0 %v630
        %v717 = vpop.f32.mrb[0].mxu0
        %v718 = vadd.f32 0.0, %v717
        %v719 = vpop.f32.mrb[0].mxu0
        %v720 = vpop.f32.mrb[0].mxu0
        %v721 = vpop.f32.mrb[0].mxu0
        %722 = vdwg.mxu0
        %v724 = vsel %vm249, %v593, 0
        %v727 = vsel %vm632, %v611, 0
        %v730 = vsel %vm632, %v619, 0
        %v733 = vsel %vm632, %v618, 0
        %735 = vmatprep.subr.bf16.mxu0 %v730
        %736 = vmatpush1.bf16.msra.mxu0 %v727
        %737 = vmatprep.subr.bf16.mxu0 0
        %738 = vmatpush1.bf16.msra.mxu0 0
        %739 = vmatprep.subr.bf16.mxu0 0
        %740 = vmatpush1.bf16.msra.mxu0 0
        %741 = vmatprep.subr.bf16.mxu0 0
        %742 = vmatpush1.bf16.msra.mxu0 0
        %743 = vmatprep.subr.bf16.mxu0 0
        %744 = vmatpush1.bf16.msra.mxu0 0
        %745 = vmatprep.subr.bf16.mxu0 0
        %746 = vmatpush1.bf16.msra.mxu0 0
        %747 = vmatprep.subr.bf16.mxu0 0
        %748 = vmatpush1.bf16.msra.mxu0 0
        %749 = vmatprep.subr.bf16.mxu0 0
        %750 = vmatpush1.bf16.msra.mxu0 0
        %751 = vmatprep.subr.bf16.mxu0 0
        %752 = vmatpush1.bf16.msra.mxu0 0
        %753 = vmatprep.subr.bf16.mxu0 0
        %754 = vmatpush1.bf16.msra.mxu0 0
        %755 = vmatprep.subr.bf16.mxu0 0
        %756 = vmatpush1.bf16.msra.mxu0 0
        %757 = vmatprep.subr.bf16.mxu0 0
        %758 = vmatpush1.bf16.msra.mxu0 0
        %759 = vmatprep.subr.bf16.mxu0 0
        %760 = vmatpush1.bf16.msra.mxu0 0
        %761 = vmatprep.subr.bf16.mxu0 0
        %762 = vmatpush1.bf16.msra.mxu0 0
        %763 = vmatprep.subr.bf16.mxu0 0
        %764 = vmatpush1.bf16.msra.mxu0 0
        %765 = vmatprep.subr.bf16.mxu0 0
        %766 = vmatpush1.bf16.msra.mxu0 0
        %767 = vmatprep.mubr.bf16.mxu0 0
        %768 = vmatmul.mubr.bf16.gmra.mrb[0].mxu0 %v724
        %v769 = vpop.f32.mrb[0].mxu0
        %v770 = vadd.f32 %v677, %v769
        %v771 = vpop.f32.mrb[0].mxu0
        %v772 = vadd.f32 %v679, %v771
        %v773 = vpop.f32.mrb[0].mxu0
        %v774 = vpop.f32.mrb[0].mxu0
        %775 = vdwg.mxu0
        %776 = vmatprep.subr.bf16.mxu0 0
        %777 = vmatpush1.bf16.msra.mxu0 %v733
        %778 = vmatprep.subr.bf16.mxu0 0
        %779 = vmatpush1.bf16.msra.mxu0 0
        %780 = vmatprep.subr.bf16.mxu0 0
        %781 = vmatpush1.bf16.msra.mxu0 0
        %782 = vmatprep.subr.bf16.mxu0 0
        %783 = vmatpush1.bf16.msra.mxu0 0
        %784 = vmatprep.subr.bf16.mxu0 0
        %785 = vmatpush1.bf16.msra.mxu0 0
        %786 = vmatprep.subr.bf16.mxu0 0
        %787 = vmatpush1.bf16.msra.mxu0 0
        %788 = vmatprep.subr.bf16.mxu0 0
        %789 = vmatpush1.bf16.msra.mxu0 0
        %790 = vmatprep.subr.bf16.mxu0 0
        %791 = vmatpush1.bf16.msra.mxu0 0
        %792 = vmatprep.subr.bf16.mxu0 0
        %793 = vmatpush1.bf16.msra.mxu0 0
        %794 = vmatprep.subr.bf16.mxu0 0
        %795 = vmatpush1.bf16.msra.mxu0 0
        %796 = vmatprep.subr.bf16.mxu0 0
        %797 = vmatpush1.bf16.msra.mxu0 0
        %798 = vmatprep.subr.bf16.mxu0 0
        %799 = vmatpush1.bf16.msra.mxu0 0
        %800 = vmatprep.subr.bf16.mxu0 0
        %801 = vmatpush1.bf16.msra.mxu0 0
        %802 = vmatprep.subr.bf16.mxu0 0
        %803 = vmatpush1.bf16.msra.mxu0 0
        %804 = vmatprep.subr.bf16.mxu0 0
        %805 = vmatpush1.bf16.msra.mxu0 0
        %806 = vmatprep.subr.bf16.mxu0 0
        %807 = vmatpush1.bf16.msra.mxu0 0
        %808 = vmatprep.mubr.bf16.mxu0 0
        %809 = vmatmul.mubr.bf16.gmra.mrb[0].mxu0 %v724
        %v810 = vpop.f32.mrb[0].mxu0
        %v811 = vadd.f32 %v718, %v810
        %v812 = vpop.f32.mrb[0].mxu0
        %v813 = vpop.f32.mrb[0].mxu0
        %v814 = vpop.f32.mrb[0].mxu0
        %815 = vdwg.mxu0
        %v816 = vld [vmem:[%s222] sm:$0x3f]
        %v818 = vcombine.high %v816, %v816
        %v820 = vunpack.c.l.s4 1983009808
        %v821 = vunpack.c.0.s8 %v820
        %v822 = vlaneseq
        %v823 = vshrl.u32 %v822, 7
        %v824 = vsub.s32 %v821, %v823
        %v825 = vrot.slane %v816, %v824
        %v827 = vunpack.c.l.s4 1983009808
        %v828 = vunpack.c.0.s8 %v827
        %v829 = vlaneseq
        %v830 = vshrl.u32 %v829, 7
        %v831 = vsub.s32 %v828, %v830
        %v832 = vrot.slane %v818, %v831
        %v833 = vcombine.high %v825, %v825
        %834 = vrot.lane.b32.xlu0 %v825, 126
        %v835 = vpop.permute.xlu0 %834
        %836 = vrot.lane.b32.xlu0 %v833, 126
        %v837 = vpop.permute.xlu0 %836
        %838 = vrot.lane.b32.xlu0 %v832, 126
        %v839 = vpop.permute.xlu0 %838
        %vm840 = vcmask 1031168
        %v841 = vsel %vm840, %v835, %v837
        %v842 = vsel %vm840, %v837, %v839
        %v844 = vsel %vm249, %v595, 0
        %v847 = vsel %vm632, %v841, 0
        %v850 = vsel %vm632, %v842, 0
        %v853 = vsel %vm632, %v839, 0
        %855 = vmatprep.subr.bf16.mxu0 %v850
        %856 = vmatpush1.bf16.msra.mxu0 %v847
        %857 = vmatprep.subr.bf16.mxu0 0
        %858 = vmatpush1.bf16.msra.mxu0 0
        %859 = vmatprep.subr.bf16.mxu0 0
        %860 = vmatpush1.bf16.msra.mxu0 0
        %861 = vmatprep.subr.bf16.mxu0 0
        %862 = vmatpush1.bf16.msra.mxu0 0
        %863 = vmatprep.subr.bf16.mxu0 0
        %864 = vmatpush1.bf16.msra.mxu0 0
        %865 = vmatprep.subr.bf16.mxu0 0
        %866 = vmatpush1.bf16.msra.mxu0 0
        %867 = vmatprep.subr.bf16.mxu0 0
        %868 = vmatpush1.bf16.msra.mxu0 0
        %869 = vmatprep.subr.bf16.mxu0 0
        %870 = vmatpush1.bf16.msra.mxu0 0
        %871 = vmatprep.subr.bf16.mxu0 0
        %872 = vmatpush1.bf16.msra.mxu0 0
        %873 = vmatprep.subr.bf16.mxu0 0
        %874 = vmatpush1.bf16.msra.mxu0 0
        %875 = vmatprep.subr.bf16.mxu0 0
        %876 = vmatpush1.bf16.msra.mxu0 0
        %877 = vmatprep.subr.bf16.mxu0 0
        %878 = vmatpush1.bf16.msra.mxu0 0
        %879 = vmatprep.subr.bf16.mxu0 0
        %880 = vmatpush1.bf16.msra.mxu0 0
        %881 = vmatprep.subr.bf16.mxu0 0
        %882 = vmatpush1.bf16.msra.mxu0 0
        %883 = vmatprep.subr.bf16.mxu0 0
        %884 = vmatpush1.bf16.msra.mxu0 0
        %885 = vmatprep.subr.bf16.mxu0 0
        %886 = vmatpush1.bf16.msra.mxu0 0
        %887 = vmatprep.mubr.bf16.mxu0 0
        %888 = vmatmul.mubr.bf16.gmra.mrb[0].mxu0 %v844
        %v889 = vpop.f32.mrb[0].mxu0
        %v890 = vadd.f32 0.0, %v889
        %v891 = vpop.f32.mrb[0].mxu0
        %v892 = vadd.f32 0.0, %v891
        %v893 = vpop.f32.mrb[0].mxu0
        %v894 = vpop.f32.mrb[0].mxu0
        %895 = vdwg.mxu0
        %896 = vmatprep.subr.bf16.mxu0 0
        %897 = vmatpush1.bf16.msra.mxu0 %v853
        %898 = vmatprep.subr.bf16.mxu0 0
        %899 = vmatpush1.bf16.msra.mxu0 0
        %900 = vmatprep.subr.bf16.mxu0 0
        %901 = vmatpush1.bf16.msra.mxu0 0
        %902 = vmatprep.subr.bf16.mxu0 0
        %903 = vmatpush1.bf16.msra.mxu0 0
        %904 = vmatprep.subr.bf16.mxu0 0
        %905 = vmatpush1.bf16.msra.mxu0 0
        %906 = vmatprep.subr.bf16.mxu0 0
        %907 = vmatpush1.bf16.msra.mxu0 0
        %908 = vmatprep.subr.bf16.mxu0 0
        %909 = vmatpush1.bf16.msra.mxu0 0
        %910 = vmatprep.subr.bf16.mxu0 0
        %911 = vmatpush1.bf16.msra.mxu0 0
        %912 = vmatprep.subr.bf16.mxu0 0
        %913 = vmatpush1.bf16.msra.mxu0 0
        %914 = vmatprep.subr.bf16.mxu0 0
        %915 = vmatpush1.bf16.msra.mxu0 0
        %916 = vmatprep.subr.bf16.mxu0 0
        %917 = vmatpush1.bf16.msra.mxu0 0
        %918 = vmatprep.subr.bf16.mxu0 0
        %919 = vmatpush1.bf16.msra.mxu0 0
        %920 = vmatprep.subr.bf16.mxu0 0
        %921 = vmatpush1.bf16.msra.mxu0 0
        %922 = vmatprep.subr.bf16.mxu0 0
        %923 = vmatpush1.bf16.msra.mxu0 0
        %924 = vmatprep.subr.bf16.mxu0 0
        %925 = vmatpush1.bf16.msra.mxu0 0
        %926 = vmatprep.subr.bf16.mxu0 0
        %927 = vmatpush1.bf16.msra.mxu0 0
        %928 = vmatprep.mubr.bf16.mxu0 0
        %929 = vmatmul.mubr.bf16.gmra.mrb[0].mxu0 %v844
        %v930 = vpop.f32.mrb[0].mxu0
        %v931 = vadd.f32 0.0, %v930
        %v932 = vpop.f32.mrb[0].mxu0
        %v933 = vpop.f32.mrb[0].mxu0
        %v934 = vpop.f32.mrb[0].mxu0
        %935 = vdwg.mxu0
        %v936 = vadd.f32 %v770, %v890
        %v937 = vadd.f32 %v772, %v892
        %v938 = vadd.f32 %v811, %v931
        %v939 = vld [vmem:[%s222] sm:$0x3f]
        %v941 = vcombine.high %v939, %v939
        %v943 = vunpack.c.l.s4 1983009808
        %v944 = vunpack.c.0.s8 %v943
        %v945 = vlaneseq
        %v946 = vshrl.u32 %v945, 7
        %v947 = vsub.s32 %v944, %v946
        %v948 = vrot.slane %v939, %v947
        %v950 = vunpack.c.l.s4 1983009808
        %v951 = vunpack.c.0.s8 %v950
        %v952 = vlaneseq
        %v953 = vshrl.u32 %v952, 7
        %v954 = vsub.s32 %v951, %v953
        %v955 = vrot.slane %v941, %v954
        %v956 = vcombine.high %v948, %v948
        %957 = vrot.lane.b32.xlu0 %v948, 110
        %v958 = vpop.permute.xlu0 %957
        %959 = vrot.lane.b32.xlu0 %v956, 110
        %v960 = vpop.permute.xlu0 %959
        %961 = vrot.lane.b32.xlu0 %v955, 110
        %v962 = vpop.permute.xlu0 %961
        %vm963 = vcmask 900096
        %v964 = vsel %vm963, %v958, %v960
        %v965 = vsel %vm963, %v960, %v962
        %v967 = vsel %vm249, %v596, 0
        %v970 = vsel %vm632, %v964, 0
        %v973 = vsel %vm632, %v965, 0
        %v976 = vsel %vm632, %v962, 0
        %978 = vmatprep.subr.bf16.mxu0 %v973
        %979 = vmatpush1.bf16.msra.mxu0 %v970
        %980 = vmatprep.subr.bf16.mxu0 0
        %981 = vmatpush1.bf16.msra.mxu0 0
        %982 = vmatprep.subr.bf16.mxu0 0
        %983 = vmatpush1.bf16.msra.mxu0 0
        %984 = vmatprep.subr.bf16.mxu0 0
        %985 = vmatpush1.bf16.msra.mxu0 0
        %986 = vmatprep.subr.bf16.mxu0 0
        %987 = vmatpush1.bf16.msra.mxu0 0
        %988 = vmatprep.subr.bf16.mxu0 0
        %989 = vmatpush1.bf16.msra.mxu0 0
        %990 = vmatprep.subr.bf16.mxu0 0
        %991 = vmatpush1.bf16.msra.mxu0 0
        %992 = vmatprep.subr.bf16.mxu0 0
        %993 = vmatpush1.bf16.msra.mxu0 0
        %994 = vmatprep.subr.bf16.mxu0 0
        %995 = vmatpush1.bf16.msra.mxu0 0
        %996 = vmatprep.subr.bf16.mxu0 0
        %997 = vmatpush1.bf16.msra.mxu0 0
        %998 = vmatprep.subr.bf16.mxu0 0
        %999 = vmatpush1.bf16.msra.mxu0 0
        %1000 = vmatprep.subr.bf16.mxu0 0
        %1001 = vmatpush1.bf16.msra.mxu0 0
        %1002 = vmatprep.subr.bf16.mxu0 0
        %1003 = vmatpush1.bf16.msra.mxu0 0
        %1004 = vmatprep.subr.bf16.mxu0 0
        %1005 = vmatpush1.bf16.msra.mxu0 0
        %1006 = vmatprep.subr.bf16.mxu0 0
        %1007 = vmatpush1.bf16.msra.mxu0 0
        %1008 = vmatprep.subr.bf16.mxu0 0
        %1009 = vmatpush1.bf16.msra.mxu0 0
        %1010 = vmatprep.mubr.bf16.mxu0 0
        %1011 = vmatmul.mubr.bf16.gmra.mrb[0].mxu0 %v967
        %v1012 = vpop.f32.mrb[0].mxu0
        %v1013 = vadd.f32 0.0, %v1012
        %v1014 = vpop.f32.mrb[0].mxu0
        %v1015 = vadd.f32 0.0, %v1014
        %v1016 = vpop.f32.mrb[0].mxu0
        %v1017 = vpop.f32.mrb[0].mxu0
        %1018 = vdwg.mxu0
        %1019 = vmatprep.subr.bf16.mxu0 0
        %1020 = vmatpush1.bf16.msra.mxu0 %v976
        %1021 = vmatprep.subr.bf16.mxu0 0
        %1022 = vmatpush1.bf16.msra.mxu0 0
        %1023 = vmatprep.subr.bf16.mxu0 0
        %1024 = vmatpush1.bf16.msra.mxu0 0
        %1025 = vmatprep.subr.bf16.mxu0 0
        %1026 = vmatpush1.bf16.msra.mxu0 0
        %1027 = vmatprep.subr.bf16.mxu0 0
        %1028 = vmatpush1.bf16.msra.mxu0 0
        %1029 = vmatprep.subr.bf16.mxu0 0
        %1030 = vmatpush1.bf16.msra.mxu0 0
        %1031 = vmatprep.subr.bf16.mxu0 0
        %1032 = vmatpush1.bf16.msra.mxu0 0
        %1033 = vmatprep.subr.bf16.mxu0 0
        %1034 = vmatpush1.bf16.msra.mxu0 0
        %1035 = vmatprep.subr.bf16.mxu0 0
        %1036 = vmatpush1.bf16.msra.mxu0 0
        %1037 = vmatprep.subr.bf16.mxu0 0
        %1038 = vmatpush1.bf16.msra.mxu0 0
        %1039 = vmatprep.subr.bf16.mxu0 0
        %1040 = vmatpush1.bf16.msra.mxu0 0
        %1041 = vmatprep.subr.bf16.mxu0 0
        %1042 = vmatpush1.bf16.msra.mxu0 0
        %1043 = vmatprep.subr.bf16.mxu0 0
        %1044 = vmatpush1.bf16.msra.mxu0 0
        %1045 = vmatprep.subr.bf16.mxu0 0
        %1046 = vmatpush1.bf16.msra.mxu0 0
        %1047 = vmatprep.subr.bf16.mxu0 0
        %1048 = vmatpush1.bf16.msra.mxu0 0
        %1049 = vmatprep.subr.bf16.mxu0 0
        %1050 = vmatpush1.bf16.msra.mxu0 0
        %1051 = vmatprep.mubr.bf16.mxu0 0
        %1052 = vmatmul.mubr.bf16.gmra.mrb[0].mxu0 %v967
        %v1053 = vpop.f32.mrb[0].mxu0
        %v1054 = vadd.f32 0.0, %v1053
        %v1055 = vpop.f32.mrb[0].mxu0
        %v1056 = vpop.f32.mrb[0].mxu0
        %v1057 = vpop.f32.mrb[0].mxu0
        %1058 = vdwg.mxu0
        %v1059 = vadd.f32 %v936, %v1013
        %v1060 = vadd.f32 %v937, %v1015
        %v1061 = vadd.f32 %v938, %v1054
        %v1062 = vld [vmem:[%s222] sm:$0x3f]
        %v1064 = vcombine.high %v1062, %v1062
        %v1066 = vunpack.c.l.s4 1983009808
        %v1067 = vunpack.c.0.s8 %v1066
        %v1068 = vlaneseq
        %v1069 = vshrl.u32 %v1068, 7
        %v1070 = vsub.s32 %v1067, %v1069
        %v1071 = vrot.slane %v1062, %v1070
        %v1073 = vunpack.c.l.s4 1983009808
        %v1074 = vunpack.c.0.s8 %v1073
        %v1075 = vlaneseq
        %v1076 = vshrl.u32 %v1075, 7
        %v1077 = vsub.s32 %v1074, %v1076
        %v1078 = vrot.slane %v1064, %v1077
        %v1079 = vcombine.high %v1071, %v1071
        %1080 = vrot.lane.b32.xlu0 %v1071, 109
        %v1081 = vpop.permute.xlu0 %1080
        %1082 = vrot.lane.b32.xlu0 %v1079, 109
        %v1083 = vpop.permute.xlu0 %1082
        %1084 = vrot.lane.b32.xlu0 %v1078, 109
        %v1085 = vpop.permute.xlu0 %1084
        %vm1086 = vcmask 891904
        %v1087 = vsel %vm1086, %v1081, %v1083
        %v1088 = vsel %vm1086, %v1083, %v1085
        %v1090 = vsel %vm249, %v597, 0
        %v1093 = vsel %vm632, %v1087, 0
        %v1096 = vsel %vm632, %v1088, 0
        %v1099 = vsel %vm632, %v1085, 0
        %1101 = vmatprep.subr.bf16.mxu0 %v1096
        %1102 = vmatpush1.bf16.msra.mxu0 %v1093
        %1103 = vmatprep.subr.bf16.mxu0 0
        %1104 = vmatpush1.bf16.msra.mxu0 0
        %1105 = vmatprep.subr.bf16.mxu0 0
        %1106 = vmatpush1.bf16.msra.mxu0 0
        %1107 = vmatprep.subr.bf16.mxu0 0
        %1108 = vmatpush1.bf16.msra.mxu0 0
        %1109 = vmatprep.subr.bf16.mxu0 0
        %1110 = vmatpush1.bf16.msra.mxu0 0
        %1111 = vmatprep.subr.bf16.mxu0 0
        %1112 = vmatpush1.bf16.msra.mxu0 0
        %1113 = vmatprep.subr.bf16.mxu0 0
        %1114 = vmatpush1.bf16.msra.mxu0 0
        %1115 = vmatprep.subr.bf16.mxu0 0
        %1116 = vmatpush1.bf16.msra.mxu0 0
        %1117 = vmatprep.subr.bf16.mxu0 0
        %1118 = vmatpush1.bf16.msra.mxu0 0
        %1119 = vmatprep.subr.bf16.mxu0 0
        %1120 = vmatpush1.bf16.msra.mxu0 0
        %1121 = vmatprep.subr.bf16.mxu0 0
        %1122 = vmatpush1.bf16.msra.mxu0 0
        %1123 = vmatprep.subr.bf16.mxu0 0
        %1124 = vmatpush1.bf16.msra.mxu0 0
        %1125 = vmatprep.subr.bf16.mxu0 0
        %1126 = vmatpush1.bf16.msra.mxu0 0
        %1127 = vmatprep.subr.bf16.mxu0 0
        %1128 = vmatpush1.bf16.msra.mxu0 0
        %1129 = vmatprep.subr.bf16.mxu0 0
        %1130 = vmatpush1.bf16.msra.mxu0 0
        %1131 = vmatprep.subr.bf16.mxu0 0
        %1132 = vmatpush1.bf16.msra.mxu0 0
        %1133 = vmatprep.mubr.bf16.mxu0 0
        %1134 = vmatmul.mubr.bf16.gmra.mrb[0].mxu0 %v1090
        %v1135 = vpop.f32.mrb[0].mxu0
        %v1136 = vadd.f32 0.0, %v1135
        %v1137 = vpop.f32.mrb[0].mxu0
        %v1138 = vadd.f32 0.0, %v1137
        %v1139 = vpop.f32.mrb[0].mxu0
        %v1140 = vpop.f32.mrb[0].mxu0
        %1141 = vdwg.mxu0
        %1142 = vmatprep.subr.bf16.mxu0 0
        %1143 = vmatpush1.bf16.msra.mxu0 %v1099
        %1144 = vmatprep.subr.bf16.mxu0 0
        %1145 = vmatpush1.bf16.msra.mxu0 0
        %1146 = vmatprep.subr.bf16.mxu0 0
        %1147 = vmatpush1.bf16.msra.mxu0 0
        %1148 = vmatprep.subr.bf16.mxu0 0
        %1149 = vmatpush1.bf16.msra.mxu0 0
        %1150 = vmatprep.subr.bf16.mxu0 0
        %1151 = vmatpush1.bf16.msra.mxu0 0
        %1152 = vmatprep.subr.bf16.mxu0 0
        %1153 = vmatpush1.bf16.msra.mxu0 0
        %1154 = vmatprep.subr.bf16.mxu0 0
        %1155 = vmatpush1.bf16.msra.mxu0 0
        %1156 = vmatprep.subr.bf16.mxu0 0
        %1157 = vmatpush1.bf16.msra.mxu0 0
        %1158 = vmatprep.subr.bf16.mxu0 0
        %1159 = vmatpush1.bf16.msra.mxu0 0
        %1160 = vmatprep.subr.bf16.mxu0 0
        %1161 = vmatpush1.bf16.msra.mxu0 0
        %1162 = vmatprep.subr.bf16.mxu0 0
        %1163 = vmatpush1.bf16.msra.mxu0 0
        %1164 = vmatprep.subr.bf16.mxu0 0
        %1165 = vmatpush1.bf16.msra.mxu0 0
        %1166 = vmatprep.subr.bf16.mxu0 0
        %1167 = vmatpush1.bf16.msra.mxu0 0
        %1168 = vmatprep.subr.bf16.mxu0 0
        %1169 = vmatpush1.bf16.msra.mxu0 0
        %1170 = vmatprep.subr.bf16.mxu0 0
        %1171 = vmatpush1.bf16.msra.mxu0 0
        %1172 = vmatprep.subr.bf16.mxu0 0
        %1173 = vmatpush1.bf16.msra.mxu0 0
        %1174 = vmatprep.mubr.bf16.mxu0 0
        %1175 = vmatmul.mubr.bf16.gmra.mrb[0].mxu0 %v1090
        %v1176 = vpop.f32.mrb[0].mxu0
        %v1177 = vadd.f32 0.0, %v1176
        %v1178 = vpop.f32.mrb[0].mxu0
        %v1179 = vpop.f32.mrb[0].mxu0
        %v1180 = vpop.f32.mrb[0].mxu0
        %1181 = vdwg.mxu0
        %v1182 = vadd.f32 %v1059, %v1136
        %v1183 = vadd.f32 %v1060, %v1138
        %v1184 = vadd.f32 %v1061, %v1177
        %v1185 = vld [vmem:[%s222] sm:$0x3f]
        %v1187 = vcombine.high %v1185, %v1185
        %v1189 = vunpack.c.l.s4 1983009808
        %v1190 = vunpack.c.0.s8 %v1189
        %v1191 = vlaneseq
        %v1192 = vshrl.u32 %v1191, 7
        %v1193 = vsub.s32 %v1190, %v1192
        %v1194 = vrot.slane %v1185, %v1193
        %v1196 = vunpack.c.l.s4 1983009808
        %v1197 = vunpack.c.0.s8 %v1196
        %v1198 = vlaneseq
        %v1199 = vshrl.u32 %v1198, 7
        %v1200 = vsub.s32 %v1197, %v1199
        %v1201 = vrot.slane %v1187, %v1200
        %v1202 = vcombine.high %v1194, %v1194
        %1203 = vrot.lane.b32.xlu0 %v1194, 108
        %v1204 = vpop.permute.xlu0 %1203
        %1205 = vrot.lane.b32.xlu0 %v1202, 108
        %v1206 = vpop.permute.xlu0 %1205
        %1207 = vrot.lane.b32.xlu0 %v1201, 108
        %v1208 = vpop.permute.xlu0 %1207
        %vm1209 = vcmask 883712
        %v1210 = vsel %vm1209, %v1204, %v1206
        %v1211 = vsel %vm1209, %v1206, %v1208
        %v1213 = vsel %vm249, %v598, 0
        %v1216 = vsel %vm632, %v1210, 0
        %v1219 = vsel %vm632, %v1211, 0
        %v1222 = vsel %vm632, %v1208, 0
        %1224 = vmatprep.subr.bf16.mxu0 %v1219
        %1225 = vmatpush1.bf16.msra.mxu0 %v1216
        %1226 = vmatprep.subr.bf16.mxu0 0
        %1227 = vmatpush1.bf16.msra.mxu0 0
        %1228 = vmatprep.subr.bf16.mxu0 0
        %1229 = vmatpush1.bf16.msra.mxu0 0
        %1230 = vmatprep.subr.bf16.mxu0 0
        %1231 = vmatpush1.bf16.msra.mxu0 0
        %1232 = vmatprep.subr.bf16.mxu0 0
        %1233 = vmatpush1.bf16.msra.mxu0 0
        %1234 = vmatprep.subr.bf16.mxu0 0
        %1235 = vmatpush1.bf16.msra.mxu0 0
        %1236 = vmatprep.subr.bf16.mxu0 0
        %1237 = vmatpush1.bf16.msra.mxu0 0
        %1238 = vmatprep.subr.bf16.mxu0 0
        %1239 = vmatpush1.bf16.msra.mxu0 0
        %1240 = vmatprep.subr.bf16.mxu0 0
        %1241 = vmatpush1.bf16.msra.mxu0 0
        %1242 = vmatprep.subr.bf16.mxu0 0
        %1243 = vmatpush1.bf16.msra.mxu0 0
        %1244 = vmatprep.subr.bf16.mxu0 0
        %1245 = vmatpush1.bf16.msra.mxu0 0
        %1246 = vmatprep.subr.bf16.mxu0 0
        %1247 = vmatpush1.bf16.msra.mxu0 0
        %1248 = vmatprep.subr.bf16.mxu0 0
        %1249 = vmatpush1.bf16.msra.mxu0 0
        %1250 = vmatprep.subr.bf16.mxu0 0
        %1251 = vmatpush1.bf16.msra.mxu0 0
        %1252 = vmatprep.subr.bf16.mxu0 0
        %1253 = vmatpush1.bf16.msra.mxu0 0
        %1254 = vmatprep.subr.bf16.mxu0 0
        %1255 = vmatpush1.bf16.msra.mxu0 0
        %1256 = vmatprep.mubr.bf16.mxu0 0
        %1257 = vmatmul.mubr.bf16.gmra.mrb[0].mxu0 %v1213
        %v1258 = vpop.f32.mrb[0].mxu0
        %v1259 = vadd.f32 0.0, %v1258
        %v1260 = vpop.f32.mrb[0].mxu0
        %v1261 = vadd.f32 0.0, %v1260
        %v1262 = vpop.f32.mrb[0].mxu0
        %v1263 = vpop.f32.mrb[0].mxu0
        %1264 = vdwg.mxu0
        %1265 = vmatprep.subr.bf16.mxu0 0
        %1266 = vmatpush1.bf16.msra.mxu0 %v1222
        %1267 = vmatprep.subr.bf16.mxu0 0
        %1268 = vmatpush1.bf16.msra.mxu0 0
        %1269 = vmatprep.subr.bf16.mxu0 0
        %1270 = vmatpush1.bf16.msra.mxu0 0
        %1271 = vmatprep.subr.bf16.mxu0 0
        %1272 = vmatpush1.bf16.msra.mxu0 0
        %1273 = vmatprep.subr.bf16.mxu0 0
        %1274 = vmatpush1.bf16.msra.mxu0 0
        %1275 = vmatprep.subr.bf16.mxu0 0
        %1276 = vmatpush1.bf16.msra.mxu0 0
        %1277 = vmatprep.subr.bf16.mxu0 0
        %1278 = vmatpush1.bf16.msra.mxu0 0
        %1279 = vmatprep.subr.bf16.mxu0 0
        %1280 = vmatpush1.bf16.msra.mxu0 0
        %1281 = vmatprep.subr.bf16.mxu0 0
        %1282 = vmatpush1.bf16.msra.mxu0 0
        %1283 = vmatprep.subr.bf16.mxu0 0
        %1284 = vmatpush1.bf16.msra.mxu0 0
        %1285 = vmatprep.subr.bf16.mxu0 0
        %1286 = vmatpush1.bf16.msra.mxu0 0
        %1287 = vmatprep.subr.bf16.mxu0 0
        %1288 = vmatpush1.bf16.msra.mxu0 0
        %1289 = vmatprep.subr.bf16.mxu0 0
        %1290 = vmatpush1.bf16.msra.mxu0 0
        %1291 = vmatprep.subr.bf16.mxu0 0
        %1292 = vmatpush1.bf16.msra.mxu0 0
        %1293 = vmatprep.subr.bf16.mxu0 0
        %1294 = vmatpush1.bf16.msra.mxu0 0
        %1295 = vmatprep.subr.bf16.mxu0 0
        %1296 = vmatpush1.bf16.msra.mxu0 0
        %1297 = vmatprep.mubr.bf16.mxu0 0
        %1298 = vmatmul.mubr.bf16.gmra.mrb[0].mxu0 %v1213
        %v1299 = vpop.f32.mrb[0].mxu0
        %v1300 = vadd.f32 0.0, %v1299
        %v1301 = vpop.f32.mrb[0].mxu0
        %v1302 = vpop.f32.mrb[0].mxu0
        %v1303 = vpop.f32.mrb[0].mxu0
        %1304 = vdwg.mxu0
        %v1305 = vadd.f32 %v1182, %v1259
        %v1306 = vadd.f32 %v1183, %v1261
        %v1307 = vadd.f32 %v1184, %v1300
        %v1308 = vld [vmem:[%s222] sm:$0x3f]
        %v1310 = vcombine.high %v1308, %v1308
        %v1312 = vunpack.c.l.s4 1983009808
        %v1313 = vunpack.c.0.s8 %v1312
        %v1314 = vlaneseq
        %v1315 = vshrl.u32 %v1314, 7
        %v1316 = vsub.s32 %v1313, %v1315
        %v1317 = vrot.slane %v1308, %v1316
        %v1319 = vunpack.c.l.s4 1983009808
        %v1320 = vunpack.c.0.s8 %v1319
        %v1321 = vlaneseq
        %v1322 = vshrl.u32 %v1321, 7
        %v1323 = vsub.s32 %v1320, %v1322
        %v1324 = vrot.slane %v1310, %v1323
        %v1325 = vcombine.high %v1317, %v1317
        %1326 = vrot.lane.b32.xlu0 %v1317, 92
        %v1327 = vpop.permute.xlu0 %1326
        %1328 = vrot.lane.b32.xlu0 %v1325, 92
        %v1329 = vpop.permute.xlu0 %1328
        %1330 = vrot.lane.b32.xlu0 %v1324, 92
        %v1331 = vpop.permute.xlu0 %1330
        %vm1332 = vcmask 752640
        %v1333 = vsel %vm1332, %v1327, %v1329
        %v1334 = vsel %vm1332, %v1329, %v1331
        %v1336 = vsel %vm249, %v599, 0
        %v1339 = vsel %vm632, %v1333, 0
        %v1342 = vsel %vm632, %v1334, 0
        %v1345 = vsel %vm632, %v1331, 0
        %1347 = vmatprep.subr.bf16.mxu0 %v1342
        %1348 = vmatpush1.bf16.msra.mxu0 %v1339
        %1349 = vmatprep.subr.bf16.mxu0 0
        %1350 = vmatpush1.bf16.msra.mxu0 0
        %1351 = vmatprep.subr.bf16.mxu0 0
        %1352 = vmatpush1.bf16.msra.mxu0 0
        %1353 = vmatprep.subr.bf16.mxu0 0
        %1354 = vmatpush1.bf16.msra.mxu0 0
        %1355 = vmatprep.subr.bf16.mxu0 0
        %1356 = vmatpush1.bf16.msra.mxu0 0
        %1357 = vmatprep.subr.bf16.mxu0 0
        %1358 = vmatpush1.bf16.msra.mxu0 0
        %1359 = vmatprep.subr.bf16.mxu0 0
        %1360 = vmatpush1.bf16.msra.mxu0 0
        %1361 = vmatprep.subr.bf16.mxu0 0
        %1362 = vmatpush1.bf16.msra.mxu0 0
        %1363 = vmatprep.subr.bf16.mxu0 0
        %1364 = vmatpush1.bf16.msra.mxu0 0
        %1365 = vmatprep.subr.bf16.mxu0 0
        %1366 = vmatpush1.bf16.msra.mxu0 0
        %1367 = vmatprep.subr.bf16.mxu0 0
        %1368 = vmatpush1.bf16.msra.mxu0 0
        %1369 = vmatprep.subr.bf16.mxu0 0
        %1370 = vmatpush1.bf16.msra.mxu0 0
        %1371 = vmatprep.subr.bf16.mxu0 0
        %1372 = vmatpush1.bf16.msra.mxu0 0
        %1373 = vmatprep.subr.bf16.mxu0 0
        %1374 = vmatpush1.bf16.msra.mxu0 0
        %1375 = vmatprep.subr.bf16.mxu0 0
        %1376 = vmatpush1.bf16.msra.mxu0 0
        %1377 = vmatprep.subr.bf16.mxu0 0
        %1378 = vmatpush1.bf16.msra.mxu0 0
        %1379 = vmatprep.mubr.bf16.mxu0 0
        %1380 = vmatmul.mubr.bf16.gmra.mrb[0].mxu0 %v1336
        %v1381 = vpop.f32.mrb[0].mxu0
        %v1382 = vadd.f32 0.0, %v1381
        %v1383 = vpop.f32.mrb[0].mxu0
        %v1384 = vadd.f32 0.0, %v1383
        %v1385 = vpop.f32.mrb[0].mxu0
        %v1386 = vpop.f32.mrb[0].mxu0
        %1387 = vdwg.mxu0
        %1388 = vmatprep.subr.bf16.mxu0 0
        %1389 = vmatpush1.bf16.msra.mxu0 %v1345
        %1390 = vmatprep.subr.bf16.mxu0 0
        %1391 = vmatpush1.bf16.msra.mxu0 0
        %1392 = vmatprep.subr.bf16.mxu0 0
        %1393 = vmatpush1.bf16.msra.mxu0 0
        %1394 = vmatprep.subr.bf16.mxu0 0
        %1395 = vmatpush1.bf16.msra.mxu0 0
        %1396 = vmatprep.subr.bf16.mxu0 0
        %1397 = vmatpush1.bf16.msra.mxu0 0
        %1398 = vmatprep.subr.bf16.mxu0 0
        %1399 = vmatpush1.bf16.msra.mxu0 0
        %1400 = vmatprep.subr.bf16.mxu0 0
        %1401 = vmatpush1.bf16.msra.mxu0 0
        %1402 = vmatprep.subr.bf16.mxu0 0
        %1403 = vmatpush1.bf16.msra.mxu0 0
        %1404 = vmatprep.subr.bf16.mxu0 0
        %1405 = vmatpush1.bf16.msra.mxu0 0
        %1406 = vmatprep.subr.bf16.mxu0 0
        %1407 = vmatpush1.bf16.msra.mxu0 0
        %1408 = vmatprep.subr.bf16.mxu0 0
        %1409 = vmatpush1.bf16.msra.mxu0 0
        %1410 = vmatprep.subr.bf16.mxu0 0
        %1411 = vmatpush1.bf16.msra.mxu0 0
        %1412 = vmatprep.subr.bf16.mxu0 0
        %1413 = vmatpush1.bf16.msra.mxu0 0
        %1414 = vmatprep.subr.bf16.mxu0 0
        %1415 = vmatpush1.bf16.msra.mxu0 0
        %1416 = vmatprep.subr.bf16.mxu0 0
        %1417 = vmatpush1.bf16.msra.mxu0 0
        %1418 = vmatprep.subr.bf16.mxu0 0
        %1419 = vmatpush1.bf16.msra.mxu0 0
        %1420 = vmatprep.mubr.bf16.mxu0 0
        %1421 = vmatmul.mubr.bf16.gmra.mrb[0].mxu0 %v1336
        %v1422 = vpop.f32.mrb[0].mxu0
        %v1423 = vadd.f32 0.0, %v1422
        %v1424 = vpop.f32.mrb[0].mxu0
        %v1425 = vpop.f32.mrb[0].mxu0
        %v1426 = vpop.f32.mrb[0].mxu0
        %1427 = vdwg.mxu0
        %v1428 = vadd.f32 %v1305, %v1382
        %v1429 = vadd.f32 %v1306, %v1384
        %v1430 = vadd.f32 %v1307, %v1423
        %v1431 = vld [vmem:[%s222] sm:$0x3f]
        %v1433 = vcombine.high %v1431, %v1431
        %v1435 = vunpack.c.l.s4 1983009808
        %v1436 = vunpack.c.0.s8 %v1435
        %v1437 = vlaneseq
        %v1438 = vshrl.u32 %v1437, 7
        %v1439 = vsub.s32 %v1436, %v1438
        %v1440 = vrot.slane %v1431, %v1439
        %v1442 = vunpack.c.l.s4 1983009808
        %v1443 = vunpack.c.0.s8 %v1442
        %v1444 = vlaneseq
        %v1445 = vshrl.u32 %v1444, 7
        %v1446 = vsub.s32 %v1443, %v1445
        %v1447 = vrot.slane %v1433, %v1446
        %v1448 = vcombine.high %v1440, %v1440
        %1449 = vrot.lane.b32.xlu0 %v1440, 91
        %v1450 = vpop.permute.xlu0 %1449
        %1451 = vrot.lane.b32.xlu0 %v1448, 91
        %v1452 = vpop.permute.xlu0 %1451
        %1453 = vrot.lane.b32.xlu0 %v1447, 91
        %v1454 = vpop.permute.xlu0 %1453
        %vm1455 = vcmask 744448
        %v1456 = vsel %vm1455, %v1450, %v1452
        %v1457 = vsel %vm1455, %v1452, %v1454
        %v1459 = vsel %vm249, %v600, 0
        %v1462 = vsel %vm632, %v1456, 0
        %v1465 = vsel %vm632, %v1457, 0
        %v1468 = vsel %vm632, %v1454, 0
        %1470 = vmatprep.subr.bf16.mxu0 %v1465
        %1471 = vmatpush1.bf16.msra.mxu0 %v1462
        %1472 = vmatprep.subr.bf16.mxu0 0
        %1473 = vmatpush1.bf16.msra.mxu0 0
        %1474 = vmatprep.subr.bf16.mxu0 0
        %1475 = vmatpush1.bf16.msra.mxu0 0
        %1476 = vmatprep.subr.bf16.mxu0 0
        %1477 = vmatpush1.bf16.msra.mxu0 0
        %1478 = vmatprep.subr.bf16.mxu0 0
        %1479 = vmatpush1.bf16.msra.mxu0 0
        %1480 = vmatprep.subr.bf16.mxu0 0
        %1481 = vmatpush1.bf16.msra.mxu0 0
        %1482 = vmatprep.subr.bf16.mxu0 0
        %1483 = vmatpush1.bf16.msra.mxu0 0
        %1484 = vmatprep.subr.bf16.mxu0 0
        %1485 = vmatpush1.bf16.msra.mxu0 0
        %1486 = vmatprep.subr.bf16.mxu0 0
        %1487 = vmatpush1.bf16.msra.mxu0 0
        %1488 = vmatprep.subr.bf16.mxu0 0
        %1489 = vmatpush1.bf16.msra.mxu0 0
        %1490 = vmatprep.subr.bf16.mxu0 0
        %1491 = vmatpush1.bf16.msra.mxu0 0
        %1492 = vmatprep.subr.bf16.mxu0 0
        %1493 = vmatpush1.bf16.msra.mxu0 0
        %1494 = vmatprep.subr.bf16.mxu0 0
        %1495 = vmatpush1.bf16.msra.mxu0 0
        %1496 = vmatprep.subr.bf16.mxu0 0
        %1497 = vmatpush1.bf16.msra.mxu0 0
        %1498 = vmatprep.subr.bf16.mxu0 0
        %1499 = vmatpush1.bf16.msra.mxu0 0
        %1500 = vmatprep.subr.bf16.mxu0 0
        %1501 = vmatpush1.bf16.msra.mxu0 0
        %1502 = vmatprep.mubr.bf16.mxu0 0
        %1503 = vmatmul.mubr.bf16.gmra.mrb[0].mxu0 %v1459
        %v1504 = vpop.f32.mrb[0].mxu0
        %v1505 = vadd.f32 0.0, %v1504
        %v1506 = vpop.f32.mrb[0].mxu0
        %v1507 = vadd.f32 0.0, %v1506
        %v1508 = vpop.f32.mrb[0].mxu0
        %v1509 = vpop.f32.mrb[0].mxu0
        %1510 = vdwg.mxu0
        %1511 = vmatprep.subr.bf16.mxu0 0
        %1512 = vmatpush1.bf16.msra.mxu0 %v1468
        %1513 = vmatprep.subr.bf16.mxu0 0
        %1514 = vmatpush1.bf16.msra.mxu0 0
        %1515 = vmatprep.subr.bf16.mxu0 0
        %1516 = vmatpush1.bf16.msra.mxu0 0
        %1517 = vmatprep.subr.bf16.mxu0 0
        %1518 = vmatpush1.bf16.msra.mxu0 0
        %1519 = vmatprep.subr.bf16.mxu0 0
        %1520 = vmatpush1.bf16.msra.mxu0 0
        %1521 = vmatprep.subr.bf16.mxu0 0
        %1522 = vmatpush1.bf16.msra.mxu0 0
        %1523 = vmatprep.subr.bf16.mxu0 0
        %1524 = vmatpush1.bf16.msra.mxu0 0
        %1525 = vmatprep.subr.bf16.mxu0 0
        %1526 = vmatpush1.bf16.msra.mxu0 0
        %1527 = vmatprep.subr.bf16.mxu0 0
        %1528 = vmatpush1.bf16.msra.mxu0 0
        %1529 = vmatprep.subr.bf16.mxu0 0
        %1530 = vmatpush1.bf16.msra.mxu0 0
        %1531 = vmatprep.subr.bf16.mxu0 0
        %1532 = vmatpush1.bf16.msra.mxu0 0
        %1533 = vmatprep.subr.bf16.mxu0 0
        %1534 = vmatpush1.bf16.msra.mxu0 0
        %1535 = vmatprep.subr.bf16.mxu0 0
        %1536 = vmatpush1.bf16.msra.mxu0 0
        %1537 = vmatprep.subr.bf16.mxu0 0
        %1538 = vmatpush1.bf16.msra.mxu0 0
        %1539 = vmatprep.subr.bf16.mxu0 0
        %1540 = vmatpush1.bf16.msra.mxu0 0
        %1541 = vmatprep.subr.bf16.mxu0 0
        %1542 = vmatpush1.bf16.msra.mxu0 0
        %1543 = vmatprep.mubr.bf16.mxu0 0
        %1544 = vmatmul.mubr.bf16.gmra.mrb[0].mxu0 %v1459
        %v1545 = vpop.f32.mrb[0].mxu0
        %v1546 = vadd.f32 0.0, %v1545
        %v1547 = vpop.f32.mrb[0].mxu0
        %v1548 = vpop.f32.mrb[0].mxu0
        %v1549 = vpop.f32.mrb[0].mxu0
        %1550 = vdwg.mxu0
        %v1551 = vadd.f32 %v1428, %v1505
        %v1552 = vadd.f32 %v1429, %v1507
        %v1553 = vadd.f32 %v1430, %v1546
        %v1554 = vld [vmem:[%s222] sm:$0x3f]
        %v1556 = vcombine.high %v1554, %v1554
        %v1558 = vunpack.c.l.s4 1983009808
        %v1559 = vunpack.c.0.s8 %v1558
        %v1560 = vlaneseq
        %v1561 = vshrl.u32 %v1560, 7
        %v1562 = vsub.s32 %v1559, %v1561
        %v1563 = vrot.slane %v1554, %v1562
        %v1565 = vunpack.c.l.s4 1983009808
        %v1566 = vunpack.c.0.s8 %v1565
        %v1567 = vlaneseq
        %v1568 = vshrl.u32 %v1567, 7
        %v1569 = vsub.s32 %v1566, %v1568
        %v1570 = vrot.slane %v1556, %v1569
        %v1571 = vcombine.high %v1563, %v1563
        %1572 = vrot.lane.b32.xlu0 %v1563, 90
        %v1573 = vpop.permute.xlu0 %1572
        %1574 = vrot.lane.b32.xlu0 %v1571, 90
        %v1575 = vpop.permute.xlu0 %1574
        %1576 = vrot.lane.b32.xlu0 %v1570, 90
        %v1577 = vpop.permute.xlu0 %1576
        %vm1578 = vcmask 736256
        %v1579 = vsel %vm1578, %v1573, %v1575
        %v1580 = vsel %vm1578, %v1575, %v1577
        %v1582 = vsel %vm249, %v601, 0
        %v1585 = vsel %vm632, %v1579, 0
        %v1588 = vsel %vm632, %v1580, 0
        %v1591 = vsel %vm632, %v1577, 0
        %1593 = vmatprep.subr.bf16.mxu0 %v1588
        %1594 = vmatpush1.bf16.msra.mxu0 %v1585
        %1595 = vmatprep.subr.bf16.mxu0 0
        %1596 = vmatpush1.bf16.msra.mxu0 0
        %1597 = vmatprep.subr.bf16.mxu0 0
        %1598 = vmatpush1.bf16.msra.mxu0 0
        %1599 = vmatprep.subr.bf16.mxu0 0
        %1600 = vmatpush1.bf16.msra.mxu0 0
        %1601 = vmatprep.subr.bf16.mxu0 0
        %1602 = vmatpush1.bf16.msra.mxu0 0
        %1603 = vmatprep.subr.bf16.mxu0 0
        %1604 = vmatpush1.bf16.msra.mxu0 0
        %1605 = vmatprep.subr.bf16.mxu0 0
        %1606 = vmatpush1.bf16.msra.mxu0 0
        %1607 = vmatprep.subr.bf16.mxu0 0
        %1608 = vmatpush1.bf16.msra.mxu0 0
        %1609 = vmatprep.subr.bf16.mxu0 0
        %1610 = vmatpush1.bf16.msra.mxu0 0
        %1611 = vmatprep.subr.bf16.mxu0 0
        %1612 = vmatpush1.bf16.msra.mxu0 0
        %1613 = vmatprep.subr.bf16.mxu0 0
        %1614 = vmatpush1.bf16.msra.mxu0 0
        %1615 = vmatprep.subr.bf16.mxu0 0
        %1616 = vmatpush1.bf16.msra.mxu0 0
        %1617 = vmatprep.subr.bf16.mxu0 0
        %1618 = vmatpush1.bf16.msra.mxu0 0
        %1619 = vmatprep.subr.bf16.mxu0 0
        %1620 = vmatpush1.bf16.msra.mxu0 0
        %1621 = vmatprep.subr.bf16.mxu0 0
        %1622 = vmatpush1.bf16.msra.mxu0 0
        %1623 = vmatprep.subr.bf16.mxu0 0
        %1624 = vmatpush1.bf16.msra.mxu0 0
        %1625 = vmatprep.mubr.bf16.mxu0 0
        %1626 = vmatmul.mubr.bf16.gmra.mrb[0].mxu0 %v1582
        %v1627 = vpop.f32.mrb[0].mxu0
        %v1628 = vadd.f32 0.0, %v1627
        %v1629 = vpop.f32.mrb[0].mxu0
        %v1630 = vadd.f32 0.0, %v1629
        %v1631 = vpop.f32.mrb[0].mxu0
        %v1632 = vpop.f32.mrb[0].mxu0
        %1633 = vdwg.mxu0
        %1634 = vmatprep.subr.bf16.mxu0 0
        %1635 = vmatpush1.bf16.msra.mxu0 %v1591
        %1636 = vmatprep.subr.bf16.mxu0 0
        %1637 = vmatpush1.bf16.msra.mxu0 0
        %1638 = vmatprep.subr.bf16.mxu0 0
        %1639 = vmatpush1.bf16.msra.mxu0 0
        %1640 = vmatprep.subr.bf16.mxu0 0
        %1641 = vmatpush1.bf16.msra.mxu0 0
        %1642 = vmatprep.subr.bf16.mxu0 0
        %1643 = vmatpush1.bf16.msra.mxu0 0
        %1644 = vmatprep.subr.bf16.mxu0 0
        %1645 = vmatpush1.bf16.msra.mxu0 0
        %1646 = vmatprep.subr.bf16.mxu0 0
        %1647 = vmatpush1.bf16.msra.mxu0 0
        %1648 = vmatprep.subr.bf16.mxu0 0
        %1649 = vmatpush1.bf16.msra.mxu0 0
        %1650 = vmatprep.subr.bf16.mxu0 0
        %1651 = vmatpush1.bf16.msra.mxu0 0
        %1652 = vmatprep.subr.bf16.mxu0 0
        %1653 = vmatpush1.bf16.msra.mxu0 0
        %1654 = vmatprep.subr.bf16.mxu0 0
        %1655 = vmatpush1.bf16.msra.mxu0 0
        %1656 = vmatprep.subr.bf16.mxu0 0
        %1657 = vmatpush1.bf16.msra.mxu0 0
        %1658 = vmatprep.subr.bf16.mxu0 0
        %1659 = vmatpush1.bf16.msra.mxu0 0
        %1660 = vmatprep.subr.bf16.mxu0 0
        %1661 = vmatpush1.bf16.msra.mxu0 0
        %1662 = vmatprep.subr.bf16.mxu0 0
        %1663 = vmatpush1.bf16.msra.mxu0 0
        %1664 = vmatprep.subr.bf16.mxu0 0
        %1665 = vmatpush1.bf16.msra.mxu0 0
        %1666 = vmatprep.mubr.bf16.mxu0 0
        %1667 = vmatmul.mubr.bf16.gmra.mrb[0].mxu0 %v1582
        %v1668 = vpop.f32.mrb[0].mxu0
        %v1669 = vadd.f32 0.0, %v1668
        %v1670 = vpop.f32.mrb[0].mxu0
        %v1671 = vpop.f32.mrb[0].mxu0
        %v1672 = vpop.f32.mrb[0].mxu0
        %1673 = vdwg.mxu0
        %v1674 = vadd.f32 %v1551, %v1628
        %v1675 = vadd.f32 %v1552, %v1630
        %v1676 = vadd.f32 %v1553, %v1669
        %1677 = vst [vmem:[%s217] sm:$0xff] %v1674
        %1678 = vst [vmem:[%s217 + $0x8] sm:$0xff] %v1675
        %vm1679 = vcmask 261120
        %1680 = vst.msk [vmem:[%s217 + $0x10] sm:$0xff] %vm1679, %v1676
        %s1681 = sand.u32 %s137, 1
        %s1682 = scalar_lea.sflag [#allocation3], %s1681
        %s1683 = sand.u32 %s137, 1
        %s1684 = smul.addr %s1683, 24
        %s1685 = scalar_lea.vmem [#allocation2], %s1684
        // Predicated region
        $region41: #{tpu_custom_call.1} parent=39 // pred_check
          %p1686 = pneg %p147
        $region42: #{tpu_custom_call.1} parent=39 // pred_check_branch
          %1688 = sbr.rel (%p1686) target = $region44
        $region43: #{tpu_custom_call.1} parent=39 // pred_region
          %s1690 = ssub.s32 384, 384
          %1691 = vsyncadd %s1682, %s1690
          %s1692 = smul.addr %s19, 3
          %s1693 = smul.addr %s1692, 128
          %s1694 = scalar_lea.hbm %s5, %s1693
          %s1696 = sshll.u32 %s1685, 4
          %s1697 = int_to_ptr.vmem [resolvable:$true] %s1696
          %1699 = dma.vmem_to_hbm [thread:$0]  %s1697, 384, %s1694, %s1682
        $region44: #{tpu_custom_call.1} parent=39 // pred_fallthru
          _
      $region40: #{tpu_custom_call.1} parent=5 // pred_fallthru
        _
      %p1700 = scmp.le.s32.totalorder 2, %s14
      // Predicated region
      $region45: #{tpu_custom_call.1} parent=5 // pred_check
        %p1701 = pneg %p1700
      $region46: #{tpu_custom_call.1} parent=5 // pred_check_branch
        %1703 = sbr.rel (%p1701) target = $region48
      $region47: #{tpu_custom_call.1} parent=5 // pred_region
        %s1704 = ssub.s32 %s14, 2
        // Predicated region
        $region49: #{tpu_custom_call.1} parent=47 // pred_check
          %p1705 = pneg %p153
        $region50: #{tpu_custom_call.1} parent=47 // pred_check_branch
          %1707 = sbr.rel (%p1705) target = $region52
        $region51: #{tpu_custom_call.1} parent=47 // pred_region
          %s1708 = sand.u32 %s138, 1
          %s1709 = scalar_lea.sflag [#allocation3], %s1708
          %s1710 = sand.u32 %s138, 1
          %s1711 = smul.addr %s1710, 24
          %s1712 = scalar_lea.vmem [#allocation2], %s1711
          %1713 = dma.done %s1709, 384
        $region52: #{tpu_custom_call.1} parent=47 // pred_fallthru
          _
      $region48: #{tpu_custom_call.1} parent=5 // pred_fallthru
        _
    $region6: #{tpu_custom_call.1} parent=1 // loop_footer
      %s18 = sadd.s32 1, %s14
    $region7: #{tpu_custom_call.1} parent=1 // loop_footer_branch
      %13 = sbr.rel target = $region3
    $region8: #{tpu_custom_call.1} parent=1 // loop_exit
      _
    %1714 = vsyncpa [#allocation3], 1
    %s1715 = scalar_lea.sflag [#allocation3], 1
    %1716 = vsyncpa %s1715, 1

</llo_original>
